<compile_context>
chip_gen: v5e
topology: v5e:2x2
jax: 0.10.0
libtpu: 0.0.40
codegen_flags: <defaults>
</compile_context>

<pallas_src>
import jax
import jax.numpy as jnp
from jax import lax
from jax.experimental import pallas as pl
from jax.experimental.pallas import tpu as pltpu

EMBED_DIMENSION = 128      # embedding_dim (tutorial uses 300; 128 keeps lanes aligned)
EMBED_MAX_NORM = 1.0       # nn.Embedding(max_norm=...)
VOCAB_SIZE = 512
BATCH = 128                # M per call; reuses every streamed weight byte 128x
TILE_V = 256               # output / weight tile width (multiple of 128)


def skipgram_kernel(idx_ref, emb_hbm, w_ref, b_ref, out_ref,
                    gather_f32, x_bf16, copy_sems):
    # idx_ref   : (B,)        int32    SMEM  -- scalar-prefetched center-word ids
    # emb_hbm   : (V, D)      float32  HBM   -- embedding table, stays in HBM
    # w_ref     : (D, TILE_V) bfloat16 VMEM  -- linear weight tile, (D, V) layout
    # b_ref     : (1, TILE_V) float32  VMEM  -- bias tile
    # out_ref   : (B, TILE_V) float32  VMEM  -- logits tile
    # gather_f32: (B, D)      float32  VMEM scratch -- DMA'd embedding rows
    # x_bf16    : (B, D)      bfloat16 VMEM scratch -- renormed activations
    # copy_sems : (B,) DMA semaphores
    B, D = gather_f32.shape

    @pl.when(pl.program_id(0) == 0)
    def _gather_and_renorm():
        # Fetch only the B indexed rows of the table (B*D*4 bytes, not V*D*4).
        def _start(i, carry):
            pltpu.make_async_copy(emb_hbm.at[pl.ds(idx_ref[i], 1)],
                                  gather_f32.at[pl.ds(i, 1)],
                                  copy_sems.at[i]).start()
            return carry
        lax.fori_loop(0, B, _start, 0)

        def _wait(i, carry):
            pltpu.make_async_copy(emb_hbm.at[pl.ds(idx_ref[i], 1)],
                                  gather_f32.at[pl.ds(i, 1)],
                                  copy_sems.at[i]).wait()
            return carry
        lax.fori_loop(0, B, _wait, 0)

        # nn.Embedding max_norm semantics (renorm rows with L2 norm > max_norm),
        # matching torch's max_norm / (norm + 1e-7) formula, in f32.
        x = gather_f32[...]
        sumsq = jnp.sum(x * x, axis=-1, keepdims=True)          # (B, 1)
        norm = jnp.sqrt(sumsq)
        scale = jnp.where(norm > jnp.float32(EMBED_MAX_NORM),
                          jnp.float32(EMBED_MAX_NORM) / (norm + jnp.float32(1e-7)),
                          jnp.float32(1.0))
        x_bf16[...] = (x * scale).astype(jnp.bfloat16)

    # Linear tile: (B, D) bf16 @ (D, TILE_V) bf16 -> f32 on the MXU.
    y = jnp.dot(x_bf16[...], w_ref[...], preferred_element_type=jnp.float32)
    out_ref[...] = y + b_ref[...]


def skipgram_forward(indices, emb_table, linear_w, linear_b):
    """indices: (B,) int32; emb_table: (V, D) f32; linear_w: (V, D); linear_b: (V,)."""
    B = indices.shape[0]
    V, D = emb_table.shape
    assert V % TILE_V == 0 and B % 8 == 0

    # One-time layout/dtype change for the weight: (V, D) f32 -> (D, V) bf16.
    # In a real model the weight would simply live in this layout permanently.
    w_dv = linear_w.T.astype(jnp.bfloat16)                 # (D, V)
    b2 = linear_b.reshape(1, V).astype(jnp.float32)        # (1, V)

    num_tiles = V // TILE_V
    cost = pl.CostEstimate(
        flops=2 * B * D * V,
        transcendentals=B,
        bytes_accessed=B * D * 4 + V * D * 2 + V * 4 + B * V * 4)

    grid_spec = pltpu.PrefetchScalarGridSpec(
        num_scalar_prefetch=1,                              # indices -> SMEM
        grid=(num_tiles,),
        in_specs=[
            pl.BlockSpec(memory_space=pl.ANY),                       # emb table (HBM)
            pl.BlockSpec((D, TILE_V), lambda j, ids: (0, j)),        # W tile
            pl.BlockSpec((1, TILE_V), lambda j, ids: (0, j)),        # bias tile
        ],
        out_specs=pl.BlockSpec((B, TILE_V), lambda j, ids: (0, j)),  # logits tile
        scratch_shapes=[
            pltpu.VMEM((B, D), jnp.float32),     # gathered rows (f32)
            pltpu.VMEM((B, D), jnp.bfloat16),    # renormed activations (bf16)
            pltpu.SemaphoreType.DMA((B,)),       # one DMA sem per gathered row
        ],
    )

    return pl.pallas_call(
        skipgram_kernel,
        out_shape=jax.ShapeDtypeStruct((B, V), jnp.float32),
        grid_spec=grid_spec,
        compiler_params=pltpu.CompilerParams(
            # "arbitrary": the step-0 gather must run before the other tiles.
            dimension_semantics=("arbitrary",)),
        cost_estimate=cost,
    )(indices.astype(jnp.int32),
      emb_table.astype(jnp.float32),
      w_dv,
      b2)


def skipgram_reference(indices, emb_table, linear_w, linear_b):
    # Same numerics as the kernel: f32 renorm, bf16 matmul with f32 accumulate.
    e = emb_table[indices]                                         # (B, D)
    norm = jnp.sqrt(jnp.sum(e * e, axis=-1, keepdims=True))
    scale = jnp.where(norm > EMBED_MAX_NORM,
                      EMBED_MAX_NORM / (norm + 1e-7), 1.0)
    e = (e * scale).astype(jnp.bfloat16)
    w = linear_w.astype(jnp.bfloat16)
    return jnp.dot(e, w.T, preferred_element_type=jnp.float32) + linear_b


if __name__ == "__main__":
    key = jax.random.PRNGKey(0)
    k_idx, k_emb, k_w, k_b = jax.random.split(key, 4)

    # Deterministic synthetic parameters (no checkpoint loading).
    indices = jax.random.randint(k_idx, (BATCH,), 0, VOCAB_SIZE, dtype=jnp.int32)
    emb_table = jax.random.normal(k_emb, (VOCAB_SIZE, EMBED_DIMENSION),
                                  dtype=jnp.float32)
    bound = 1.0 / (EMBED_DIMENSION ** 0.5)       # nn.Linear default init range
    linear_w = jax.random.uniform(k_w, (VOCAB_SIZE, EMBED_DIMENSION),
                                  minval=-bound, maxval=bound, dtype=jnp.float32)
    linear_b = jax.random.uniform(k_b, (VOCAB_SIZE,),
                                  minval=-bound, maxval=bound, dtype=jnp.float32)

    out = skipgram_forward(indices, emb_table, linear_w, linear_b)
    out = jax.block_until_ready(out)

    ref = skipgram_reference(indices, emb_table, linear_w, linear_b)
    assert out.shape == (BATCH, VOCAB_SIZE)
    assert jnp.allclose(out, ref, atol=2e-3, rtol=2e-3), (
        float(jnp.max(jnp.abs(out - ref))))

    print("KERNEL_OK")
</pallas_src>

<mosaic_0001>
module attributes {stable_mosaic.version = 11 : i64} {
  func.func @skipgram_kernel(%arg0: i32, %arg1: memref<128xi32, #tpu.memory_space<smem>>, %arg2: memref<512x128xf32, #tpu.memory_space<any>>, %arg3: memref<128x256xbf16, #tpu.memory_space<vmem>>, %arg4: memref<1x256xf32, #tpu.memory_space<vmem>>, %arg5: memref<128x256xf32, #tpu.memory_space<vmem>>, %arg6: memref<128x128xf32, #tpu.memory_space<vmem>>, %arg7: memref<128x128xbf16, #tpu.memory_space<vmem>>, %arg8: memref<128x!tpu.dma_semaphore, #tpu.memory_space<semaphore_mem>>) attributes {dimension_semantics = [#tpu.dimension_semantics<arbitrary>], iteration_bounds = array<i64: 2>, scalar_prefetch = 1 : i64, scratch_operands = 3 : i64, tpu.core_type = #tpu.core_type<tc>, window_params = [{}, {transform_indices = @transform_1, window_bounds = array<i64: 128, 256>}, {transform_indices = @transform_2, window_bounds = array<i64: 1, 256>}, {transform_indices = @transform_3, window_bounds = array<i64: 128, 256>}]} {
    %c0_i32 = arith.constant 0 : i32
    %0 = arith.cmpi eq, %arg0, %c0_i32 : i32
    %1 = arith.extui %0 : i1 to i32
    %c0_i32_0 = arith.constant 0 : i32
    %2 = arith.cmpi ne, %1, %c0_i32_0 : i32
    scf.if %2 {
      %c0_i32_8 = arith.constant 0 : i32
      %c128_i32 = arith.constant 128 : i32
      %10 = arith.addi %c0_i32_8, %c128_i32 : i32
      %c1_i32 = arith.constant 1 : i32
      scf.for %arg9 = %c0_i32_8 to %10 step %c1_i32  : i32 {
        %29 = arith.index_cast %arg9 : i32 to index
        %30 = memref.load %arg1[%29] : memref<128xi32, #tpu.memory_space<smem>>
        %c0_i32_23 = arith.constant 0 : i32
        %31 = tpu.memref_slice %arg2[%30, %c0_i32_23] : memref<512x128xf32, #tpu.memory_space<any>> -> memref<1x128xf32, #tpu.memory_space<any>>
        %c0_i32_24 = arith.constant 0 : i32
        %32 = tpu.memref_slice %arg6[%arg9, %c0_i32_24] : memref<128x128xf32, #tpu.memory_space<vmem>> -> memref<1x128xf32, #tpu.memory_space<vmem>>
        %33 = tpu.memref_slice %arg8[%arg9] : memref<128x!tpu.dma_semaphore, #tpu.memory_space<semaphore_mem>> -> memref<1x!tpu.dma_semaphore, #tpu.memory_space<semaphore_mem>>
        %34 = tpu.memref_squeeze %33 : memref<1x!tpu.dma_semaphore, #tpu.memory_space<semaphore_mem>> -> memref<!tpu.dma_semaphore, #tpu.memory_space<semaphore_mem>>
        tpu.enqueue_dma source(%31 : memref<1x128xf32, #tpu.memory_space<any>>) target(%32 : memref<1x128xf32, #tpu.memory_space<vmem>>) target_semaphore(%34 : memref<!tpu.dma_semaphore, #tpu.memory_space<semaphore_mem>>)
      }
      %c128_i32_9 = arith.constant 128 : i32
      %c0_i32_10 = arith.constant 0 : i32
      %c128_i32_11 = arith.constant 128 : i32
      %11 = arith.addi %c0_i32_10, %c128_i32_11 : i32
      %c1_i32_12 = arith.constant 1 : i32
      scf.for %arg9 = %c0_i32_10 to %11 step %c1_i32_12  : i32 {
        %29 = arith.index_cast %arg9 : i32 to index
        %30 = memref.load %arg1[%29] : memref<128xi32, #tpu.memory_space<smem>>
        %c0_i32_23 = arith.constant 0 : i32
        %31 = tpu.memref_slice %arg2[%30, %c0_i32_23] : memref<512x128xf32, #tpu.memory_space<any>> -> memref<1x128xf32, #tpu.memory_space<any>>
        %c0_i32_24 = arith.constant 0 : i32
        %32 = tpu.memref_slice %arg6[%arg9, %c0_i32_24] : memref<128x128xf32, #tpu.memory_space<vmem>> -> memref<1x128xf32, #tpu.memory_space<vmem>>
        %33 = tpu.memref_slice %arg8[%arg9] : memref<128x!tpu.dma_semaphore, #tpu.memory_space<semaphore_mem>> -> memref<1x!tpu.dma_semaphore, #tpu.memory_space<semaphore_mem>>
        %34 = tpu.memref_squeeze %33 : memref<1x!tpu.dma_semaphore, #tpu.memory_space<semaphore_mem>> -> memref<!tpu.dma_semaphore, #tpu.memory_space<semaphore_mem>>
        tpu.wait_dma2 semaphore(%34 : memref<!tpu.dma_semaphore, #tpu.memory_space<semaphore_mem>>) src(%31 : memref<1x128xf32, #tpu.memory_space<any>>) dst(%32 : memref<1x128xf32, #tpu.memory_space<vmem>>)
      }
      %c128_i32_13 = arith.constant 128 : i32
      %c0_14 = arith.constant 0 : index
      %c0_15 = arith.constant 0 : index
      %12 = vector.load %arg6[%c0_14, %c0_15] : memref<128x128xf32, #tpu.memory_space<vmem>>, vector<128x128xf32>
      %13 = arith.mulf %12, %12 : vector<128x128xf32>
      %cst_16 = arith.constant dense<0.000000e+00> : vector<128xf32>
      %14 = vector.multi_reduction <add>, %13, %cst_16 [1] : vector<128x128xf32> to vector<128xf32>
      %15 = vector.shape_cast %14 : vector<128xf32> to vector<128x1xf32>
      %16 = math.sqrt %15 : vector<128x1xf32>
      %cst_17 = arith.constant 1.000000e+00 : f32
      %17 = vector.broadcast %cst_17 : f32 to vector<128x1xf32>
      %18 = arith.cmpf ogt, %16, %17 : vector<128x1xf32>
      %cst_18 = arith.constant 1.000000e-07 : f32
      %19 = vector.broadcast %cst_18 : f32 to vector<128x1xf32>
      %20 = arith.addf %16, %19 : vector<128x1xf32>
      %cst_19 = arith.constant 1.000000e+00 : f32
      %21 = vector.broadcast %cst_19 : f32 to vector<128x1xf32>
      %22 = arith.divf %21, %20 : vector<128x1xf32>
      %cst_20 = arith.constant 1.000000e+00 : f32
      %23 = vector.broadcast %cst_20 : f32 to vector<128x1xf32>
      %24 = arith.select %18, %22, %23 : vector<128x1xi1>, vector<128x1xf32>
      %25 = vector.broadcast %24 : vector<128x1xf32> to vector<128x128xf32>
      %26 = arith.mulf %12, %25 : vector<128x128xf32>
      %27 = arith.truncf %26 : vector<128x128xf32> to vector<128x128xbf16>
      %c0_21 = arith.constant 0 : index
      %c0_22 = arith.constant 0 : index
      %28 = vector.load %arg7[%c0_21, %c0_22] : memref<128x128xbf16, #tpu.memory_space<vmem>>, vector<128x128xbf16>
      tpu.vector_store %arg7[%c0_21, %c0_22], %27 {strides = array<i32>} : memref<128x128xbf16, #tpu.memory_space<vmem>>, vector<128x128xbf16>,
    } else {
    }
    %c0 = arith.constant 0 : index
    %c0_1 = arith.constant 0 : index
    %3 = vector.load %arg7[%c0, %c0_1] : memref<128x128xbf16, #tpu.memory_space<vmem>>, vector<128x128xbf16>
    %c0_2 = arith.constant 0 : index
    %c0_3 = arith.constant 0 : index
    %4 = vector.load %arg3[%c0_2, %c0_3] : memref<128x256xbf16, #tpu.memory_space<vmem>>, vector<128x256xbf16>
    %cst = arith.constant dense<0.000000e+00> : vector<128x256xf32>
    %5 = tpu.matmul %3, %4, %cst {dimension_numbers = #tpu.dot_dimension_numbers<[1], [0], [0], [1], [0, 0, 1, 1], [], []>} : vector<128x128xbf16>, vector<128x256xbf16>, vector<128x256xf32> -> vector<128x256xf32>
    %c0_4 = arith.constant 0 : index
    %c0_5 = arith.constant 0 : index
    %6 = vector.load %arg4[%c0_4, %c0_5] : memref<1x256xf32, #tpu.memory_space<vmem>>, vector<1x256xf32>
    %7 = vector.broadcast %6 : vector<1x256xf32> to vector<128x256xf32>
    %8 = arith.addf %5, %7 : vector<128x256xf32>
    %c0_6 = arith.constant 0 : index
    %c0_7 = arith.constant 0 : index
    %9 = vector.load %arg5[%c0_6, %c0_7] : memref<128x256xf32, #tpu.memory_space<vmem>>, vector<128x256xf32>
    tpu.vector_store %arg5[%c0_6, %c0_7], %8 {strides = array<i32>} : memref<128x256xf32, #tpu.memory_space<vmem>>, vector<128x256xf32>,
    return
  }
  func.func @transform_1(%arg0: i32, %arg1: memref<128xi32, #tpu.memory_space<smem>>) -> (i32, i32) {
    %c0_i32 = arith.constant 0 : i32
    %c0_i32_0 = arith.constant 0 : i32
    return %c0_i32, %arg0 : i32, i32
  }
  func.func @transform_2(%arg0: i32, %arg1: memref<128xi32, #tpu.memory_space<smem>>) -> (i32, i32) {
    %c0_i32 = arith.constant 0 : i32
    %c0_i32_0 = arith.constant 0 : i32
    return %c0_i32, %arg0 : i32, i32
  }
  func.func @transform_3(%arg0: i32, %arg1: memref<128xi32, #tpu.memory_space<smem>>) -> (i32, i32) {
    %c0_i32 = arith.constant 0 : i32
    %c0_i32_0 = arith.constant 0 : i32
    return %c0_i32, %arg0 : i32, i32
  }
}

</mosaic_0001>

<llo_original>
// kernel: tpu_custom_call.1
$region0: #{tpu_custom_call.1}
  #allocation0 [shape = 'u32[]', space=smem, size = 0x4, offset = 0x4, fixed_abs, tag = 'smem constant byte address 0x4 - core index']
  #allocation1 [shape = 'u32[72,128]{1,0:T(1,128)}', space=vmem, size = 0x9000, scoped, tag = 'internal scratch']
  #allocation2 [shape = 'f32[128,128]{1,0:T(8,128)}', space=vmem, size = 0x10000, scoped, tag = 'scratch operand']
  #allocation3 [shape = 'bf16[128,128]{1,0:T(8,128)(2,1)}', space=vmem, size = 0x8000, scoped, tag = 'scratch operand']
  #allocation4 [shape = 's32[128]{0}', space=sflag, size = 0x200, scoped, tag = 'scratch operand']
  #allocation5 [shape = 's32[1]{0}', space=sflag, size = 0x4, scoped, tag = 'scoped memory for tpu_custom_call.1']
  #allocation6 [shape = 'u8[512]{0}', space=smem, size = 0x200, scoped, tag = 'prefetched SMEM operand 0']
  #allocation13 [shape = 's32[]', space=sflag, size = 0x4, offset = 0, fixed_abs, tag = 'sflag constant byte address 0x0 - dummy sync flag']
  #allocation14 [shape = 's32[]', space=sflag, size = 0x4, offset = 0, fixed_abs, tag = 'sflag constant byte address 0x0 - dummy sync flag']
  #allocation15 [shape = 'u32[]', space=smem, size = 0x4, offset = 0x44, fixed_abs, tag = 'smem constant byte address 0x44 - assertion arg 0']
  #allocation16 [shape = 'u32[]', space=smem, size = 0x4, offset = 0x48, fixed_abs, tag = 'smem constant byte address 0x48 - assertion arg 1']
  %s0 = inlined_call_operand.hbm [shape: s32[128], index: 0, kind: input, shape index: {}]
  %s1 = inlined_call_operand.hbm [shape: f32[512,128], index: 1, kind: input, shape index: {}]
  %s2 = inlined_call_operand.hbm [shape: bf16[128,512], index: 2, kind: input, shape index: {}]
  %s3 = inlined_call_operand.hbm [shape: f32[1,512], index: 3, kind: input, shape index: {}]
  %s4 = inlined_call_operand.hbm [shape: f32[128,512], index: 4, kind: output, shape index: {}]
  %s5 = sld [smem:[#allocation0]]
  $region71: #{tpu_custom_call.1} parent=0
    _
  %s7 = ssub.s32 1, %s5
  %s8 = scalar_select 0, %s7, %s5
  %s10 = sshll.u32 %s0, 4
  %s11 = int_to_ptr.hbm [resolvable:$true] %s10
  %13 = dma.hbm_to_smem %s11, 16, [#allocation6], [#allocation5]
  %15 = dma.done [#allocation5], 16
  %16 = sfence
  $region1: #{tpu_custom_call.1} parent=0
    #allocation7 [shape = 'u8[131072]{0}', space=vmem, size = 0x20000, scoped, tag = 'input window, operand 2']
    #allocation8 [shape = 's32[2]{0}', space=sflag, size = 0x8, scoped, tag = 'scoped memory for tpu_custom_call.1']
    #allocation9 [shape = 's32[2]{0}', space=sflag, size = 0x8, scoped, tag = 'scoped memory for tpu_custom_call.1']
    #allocation10 [shape = 'u8[2048]{0}', space=vmem, size = 0x800, scoped, tag = 'input window, operand 3']
    #allocation11 [shape = 's32[2]{0}', space=sflag, size = 0x8, scoped, tag = 'scoped memory for tpu_custom_call.1']
    #allocation12 [shape = 'u8[262144]{0}', space=vmem, size = 0x40000, scoped, tag = 'output window, operand 0']
    %17 = vsyncpa [#allocation8], 0
    %s18 = scalar_lea.sflag [#allocation8], 1
    %19 = vsyncpa %s18, 0
    %20 = vsyncpa [#allocation11], 0
    %s21 = scalar_lea.sflag [#allocation11], 1
    %22 = vsyncpa %s21, 0
    %23 = vsyncpa [#allocation9], 0
    %s24 = scalar_lea.sflag [#allocation9], 1
    %25 = vsyncpa %s24, 0
    loop: start=0, step=1, limit=4
    $region2: #{tpu_custom_call.1} parent=1 // loop_pre_header
      _
    $region3: #{tpu_custom_call.1} parent=1 // loop_header
      %s27 = sphi 0, %s31
      %p28 = scmp.ge.s32.totalorder %s27, 4
      %s37 = sphi 0, %s39
      %s40 = sphi 0, %s37
      %s41 = sphi 0, %s40
      %s57 = sphi 0, %s41
      %s63 = sphi 0, %s65
      %s66 = sphi 0, %s63
      %s67 = sphi 0, %s66
      %s83 = sphi 0, %s67
      %s89 = sphi 0, %s91
      %s92 = sphi 0, %s89
      %s93 = sphi 0, %s92
      %s109 = sphi 0, %s93
    $region4: #{tpu_custom_call.1} parent=1 // loop_header_branch
      %30 = sbr.rel (%p28) target = $region8
    $region5: #{tpu_custom_call.1} parent=1 // loop_body
      %s32 = ssub.s32 %s27, 1
      %s33 = ssub.s32 %s27, 2
      %s34 = sadd.s32 %s27, 1
      %s35 = ssub.s32 %s27, %s34
      %p36 = scmp.eq.s32.totalorder %s35, 0
      %s38 = sadd.s32 %s37, 1
      %s39 = scalar_select %p36, %s37, %s38
      %p42 = pneg %p36
      %p43 = scmp.eq.s32.totalorder %s27, 1
      %p44 = por %p42, %p43
      %p45 = scmp.ne.s32.totalorder %s37, %s40
      %p46 = scmp.eq.s32.totalorder %s27, 0
      %p47 = por %p45, %p46
      %p48 = scmp.ne.s32.totalorder %s37, %s40
      %p49 = scmp.eq.s32.totalorder %s32, 1
      %p50 = por %p48, %p49
      %p51 = scmp.ne.s32.totalorder %s40, %s41
      %p52 = scmp.eq.s32.totalorder %s32, 0
      %p53 = por %p51, %p52
      %p54 = scmp.ne.s32.totalorder %s40, %s41
      %p55 = scmp.eq.s32.totalorder %s33, 1
      %p56 = por %p54, %p55
      %p58 = scmp.ne.s32.totalorder %s41, %s57
      %p59 = scmp.eq.s32.totalorder %s33, 0
      %p60 = por %p58, %p59
      %s61 = ssub.s32 %s27, %s34
      %p62 = scmp.eq.s32.totalorder %s61, 0
      %s64 = sadd.s32 %s63, 1
      %s65 = scalar_select %p62, %s63, %s64
      %p68 = pneg %p62
      %p69 = scmp.eq.s32.totalorder %s27, 1
      %p70 = por %p68, %p69
      %p71 = scmp.ne.s32.totalorder %s63, %s66
      %p72 = scmp.eq.s32.totalorder %s27, 0
      %p73 = por %p71, %p72
      %p74 = scmp.ne.s32.totalorder %s63, %s66
      %p75 = scmp.eq.s32.totalorder %s32, 1
      %p76 = por %p74, %p75
      %p77 = scmp.ne.s32.totalorder %s66, %s67
      %p78 = scmp.eq.s32.totalorder %s32, 0
      %p79 = por %p77, %p78
      %p80 = scmp.ne.s32.totalorder %s66, %s67
      %p81 = scmp.eq.s32.totalorder %s33, 1
      %p82 = por %p80, %p81
      %p84 = scmp.ne.s32.totalorder %s67, %s83
      %p85 = scmp.eq.s32.totalorder %s33, 0
      %p86 = por %p84, %p85
      %s87 = ssub.s32 %s27, %s34
      %p88 = scmp.eq.s32.totalorder %s87, 0
      %s90 = sadd.s32 %s89, 1
      %s91 = scalar_select %p88, %s89, %s90
      %p94 = pneg %p88
      %p95 = scmp.eq.s32.totalorder %s27, 1
      %p96 = por %p94, %p95
      %p97 = scmp.ne.s32.totalorder %s89, %s92
      %p98 = scmp.eq.s32.totalorder %s27, 0
      %p99 = por %p97, %p98
      %p100 = scmp.ne.s32.totalorder %s89, %s92
      %p101 = scmp.eq.s32.totalorder %s32, 1
      %p102 = por %p100, %p101
      %p103 = scmp.ne.s32.totalorder %s92, %s93
      %p104 = scmp.eq.s32.totalorder %s32, 0
      %p105 = por %p103, %p104
      %p106 = scmp.ne.s32.totalorder %s92, %s93
      %p107 = scmp.eq.s32.totalorder %s33, 1
      %p108 = por %p106, %p107
      %p110 = scmp.ne.s32.totalorder %s93, %s109
      %p111 = scmp.eq.s32.totalorder %s33, 0
      %p112 = por %p110, %p111
      %p113 = scmp.le.s32.totalorder 1, %s27
      %p114 = scmp.lt.s32.totalorder %s27, 3
      %p115 = pnand %p113, %p114
      %p116 = pneg %p115
      // Predicated region
      $region9: #{tpu_custom_call.1} parent=5 // pred_check
        _
      $region10: #{tpu_custom_call.1} parent=5 // pred_check_branch
        %118 = sbr.rel (%p115) target = $region12
      $region11: #{tpu_custom_call.1} parent=5 // pred_region
        %s119 = ssub.s32 %s27, 1
      $region12: #{tpu_custom_call.1} parent=5 // pred_fallthru
        _
      %p120 = scmp.lt.s32.totalorder %s27, 2
      // Predicated region
      $region13: #{tpu_custom_call.1} parent=5 // pred_check
        %p121 = pneg %p120
      $region14: #{tpu_custom_call.1} parent=5 // pred_check_branch
        %123 = sbr.rel (%p121) target = $region16
      $region15: #{tpu_custom_call.1} parent=5 // pred_region
        // Predicated region
        $region17: #{tpu_custom_call.1} parent=15 // pred_check
          %p124 = pneg %p47
        $region18: #{tpu_custom_call.1} parent=15 // pred_check_branch
          %126 = sbr.rel (%p124) target = $region20
        $region19: #{tpu_custom_call.1} parent=15 // pred_region
          %s127 = sand.u32 %s37, 1
          %s128 = scalar_lea.sflag [#allocation8], %s127
          %s129 = sand.u32 %s37, 1
          %s130 = smul.addr %s129, 128
          %s131 = scalar_lea.vmem [#allocation7], %s130
          %s132 = smul.u32 2, %s27
          %134 = vsyncadd %s128, 0
          %s135 = smul.addr %s132, 4
          %s136 = scalar_lea.hbm %s2, %s135
          %s137 = sshll.u32 %s136, 4
          %s138 = int_to_ptr.hbm [resolvable:$true] %s137
          %s139 = sshll.u32 %s131, 4
          %s140 = int_to_ptr.vmem [resolvable:$true] %s139
          %145 = dma.hbm_to_vmem [thread:$0]  %s138, 2048, %s140, %s128, 256, 128, 8
        $region20: #{tpu_custom_call.1} parent=15 // pred_fallthru
          _
        // Predicated region
        $region21: #{tpu_custom_call.1} parent=15 // pred_check
          %p146 = pneg %p73
        $region22: #{tpu_custom_call.1} parent=15 // pred_check_branch
          %148 = sbr.rel (%p146) target = $region24
        $region23: #{tpu_custom_call.1} parent=15 // pred_region
          %s149 = sand.u32 %s63, 1
          %s150 = scalar_lea.sflag [#allocation11], %s149
          %s151 = sand.u32 %s63, 1
          %s152 = smul.addr %s151, 2
          %s153 = scalar_lea.vmem [#allocation10], %s152
          %s154 = smul.u32 2, %s27
          %156 = vsyncadd %s150, 0
          %s157 = scalar_lea.hbm %s3, %s154
          %s159 = sshll.u32 %s157, 4
          %s160 = int_to_ptr.hbm [resolvable:$true] %s159
          %s161 = sshll.u32 %s153, 4
          %s162 = int_to_ptr.vmem [resolvable:$true] %s161
          %164 = dma.hbm_to_vmem [thread:$0]  %s160, 32, %s162, %s150
        $region24: #{tpu_custom_call.1} parent=15 // pred_fallthru
          _
      $region16: #{tpu_custom_call.1} parent=5 // pred_fallthru
        _
      %p165 = scmp.le.s32.totalorder 1, %s27
      %p166 = scmp.lt.s32.totalorder %s27, 3
      %p167 = pnand %p165, %p166
      %p168 = pneg %p167
      // Predicated region
      $region25: #{tpu_custom_call.1} parent=5 // pred_check
        _
      $region26: #{tpu_custom_call.1} parent=5 // pred_check_branch
        %170 = sbr.rel (%p167) target = $region28
      $region27: #{tpu_custom_call.1} parent=5 // pred_region
        %s171 = ssub.s32 %s27, 1
        %s172 = sand.u32 %s40, 1
        %s173 = scalar_lea.sflag [#allocation8], %s172
        %s174 = sand.u32 %s40, 1
        %s175 = smul.addr %s174, 128
        %s176 = scalar_lea.vmem [#allocation7], %s175
        // Predicated region
        $region29: #{tpu_custom_call.1} parent=27 // pred_check
          %p177 = pneg %p53
        $region30: #{tpu_custom_call.1} parent=27 // pred_check_branch
          %179 = sbr.rel (%p177) target = $region32
        $region31: #{tpu_custom_call.1} parent=27 // pred_region
          %181 = dma.done %s173, 2048
        $region32: #{tpu_custom_call.1} parent=27 // pred_fallthru
          _
        %s182 = sand.u32 %s66, 1
        %s183 = scalar_lea.sflag [#allocation11], %s182
        %s184 = sand.u32 %s66, 1
        %s185 = smul.addr %s184, 2
        %s186 = scalar_lea.vmem [#allocation10], %s185
        // Predicated region
        $region33: #{tpu_custom_call.1} parent=27 // pred_check
          %p187 = pneg %p79
        $region34: #{tpu_custom_call.1} parent=27 // pred_check_branch
          %189 = sbr.rel (%p187) target = $region36
        $region35: #{tpu_custom_call.1} parent=27 // pred_region
          %191 = dma.done %s183, 32
        $region36: #{tpu_custom_call.1} parent=27 // pred_fallthru
          _
        %s192 = sand.u32 %s40, 1
        %s193 = scalar_lea.sflag [#allocation8], %s192
        %s194 = sand.u32 %s40, 1
        %s195 = smul.addr %s194, 128
        %s196 = scalar_lea.vmem [#allocation7], %s195
        %p197 = pneg %p53
        %p198 = pneg %p50
        %s199 = sand.u32 %s66, 1
        %s200 = scalar_lea.sflag [#allocation11], %s199
        %s201 = sand.u32 %s66, 1
        %s202 = smul.addr %s201, 2
        %s203 = scalar_lea.vmem [#allocation10], %s202
        %p204 = pneg %p79
        %p205 = pneg %p76
        %p206 = pneg %p105
        %p207 = pneg %p102
        %s208 = sand.u32 %s92, 1
        %s209 = scalar_lea.sflag [#allocation9], %s208
        %s210 = sand.u32 %s92, 1
        %s211 = smul.addr %s210, 256
        %s212 = scalar_lea.vmem [#allocation12], %s211
        %s213 = smul.u32 2, %s32
        %s214 = smul.u32 2, %s32
        %s215 = smul.u32 2, %s32
        %p216 = scmp.eq.s32.totalorder %s32, 0
        // Predicated region
        $region37: #{tpu_custom_call.1} parent=27 // pred_check
          %p217 = pneg %p216
        $region38: #{tpu_custom_call.1} parent=27 // pred_check_branch
          %219 = sbr.rel (%p217) target = $region40
        $region39: #{tpu_custom_call.1} parent=27 // pred_region
          loop: start=0, step=1, limit=128
          $region41: #{tpu_custom_call.1} parent=39 // loop_pre_header
            _
          $region42: #{tpu_custom_call.1} parent=39 // loop_header
            %s221 = sphi 0, %s225
            %p222 = scmp.ge.s32.totalorder %s221, 128
          $region43: #{tpu_custom_call.1} parent=39 // loop_header_branch
            %224 = sbr.rel (%p222) target = $region47
          $region44: #{tpu_custom_call.1} parent=39 // loop_body
            %s226 = sld [smem:[#allocation6 + %s221]]
            %s227 = scalar_lea.hbm %s1, %s226
            %s228 = scalar_lea.vmem [#allocation2], %s221
            %s229 = scalar_lea.sflag [#allocation4], %s221
            // Predicated region
            $region48: #{tpu_custom_call.1} parent=44 // pred_check
              _
            $region49: #{tpu_custom_call.1} parent=44 // pred_check_branch
              %231 = sbr.rel target = $region51
            $region50: #{tpu_custom_call.1} parent=44 // pred_region
              %232 = sst [smem:[#allocation15]] [#allocation14]
              %233 = sst [smem:[#allocation16]] [#allocation13]
            $region51: #{tpu_custom_call.1} parent=44 // pred_fallthru
              _
            %235 = shalt.err (0)
            %s237 = sshll.u32 %s227, 4
            %s238 = int_to_ptr.hbm [resolvable:$true] %s237
            %s239 = sshll.u32 %s228, 4
            %s240 = int_to_ptr.vmem [resolvable:$true] %s239
            %242 = dma.hbm_to_vmem [thread:$0]  %s238, 16, %s240, %s229
          $region45: #{tpu_custom_call.1} parent=39 // loop_footer
            %s225 = sadd.s32 1, %s221
          $region46: #{tpu_custom_call.1} parent=39 // loop_footer_branch
            %220 = sbr.rel target = $region42
          $region47: #{tpu_custom_call.1} parent=39 // loop_exit
            _
          loop: start=0, step=1, limit=128
          $region52: #{tpu_custom_call.1} parent=39 // loop_pre_header
            _
          $region53: #{tpu_custom_call.1} parent=39 // loop_header
            %s244 = sphi 0, %s248
            %p245 = scmp.ge.s32.totalorder %s244, 128
          $region54: #{tpu_custom_call.1} parent=39 // loop_header_branch
            %247 = sbr.rel (%p245) target = $region58
          $region55: #{tpu_custom_call.1} parent=39 // loop_body
            %s249 = sld [smem:[#allocation6 + %s244]]
            %s250 = scalar_lea.sflag [#allocation4], %s244
            %s251 = smul.u32 1, 1
            %s252 = sshll.u32 %s251, 4
            %253 = dma.done %s250, %s252
          $region56: #{tpu_custom_call.1} parent=39 // loop_footer
            %s248 = sadd.s32 1, %s244
          $region57: #{tpu_custom_call.1} parent=39 // loop_footer_branch
            %243 = sbr.rel target = $region53
          $region58: #{tpu_custom_call.1} parent=39 // loop_exit
            _
          %v254 = vld [vmem:[#allocation2] sm:$0xff]
          %v255 = vld [vmem:[#allocation2 + $0x8] sm:$0xff]
          %v256 = vld [vmem:[#allocation2 + $0x10] sm:$0xff]
          %v257 = vld [vmem:[#allocation2 + $0x18] sm:$0xff]
          %v258 = vld [vmem:[#allocation2 + $0x20] sm:$0xff]
          %v259 = vld [vmem:[#allocation2 + $0x28] sm:$0xff]
          %v260 = vld [vmem:[#allocation2 + $0x30] sm:$0xff]
          %v261 = vld [vmem:[#allocation2 + $0x38] sm:$0xff]
          %v262 = vld [vmem:[#allocation2 + $0x40] sm:$0xff]
          %v263 = vld [vmem:[#allocation2 + $0x48] sm:$0xff]
          %v264 = vld [vmem:[#allocation2 + $0x50] sm:$0xff]
          %v265 = vld [vmem:[#allocation2 + $0x58] sm:$0xff]
          %v266 = vld [vmem:[#allocation2 + $0x60] sm:$0xff]
          %v267 = vld [vmem:[#allocation2 + $0x68] sm:$0xff]
          %v268 = vld [vmem:[#allocation2 + $0x70] sm:$0xff]
          %v269 = vld [vmem:[#allocation2 + $0x78] sm:$0xff]
          %v270 = vmul.f32 %v254, %v254
          %v271 = vmul.f32 %v255, %v255
          %v272 = vmul.f32 %v256, %v256
          %v273 = vmul.f32 %v257, %v257
          %v274 = vmul.f32 %v258, %v258
          %v275 = vmul.f32 %v259, %v259
          %v276 = vmul.f32 %v260, %v260
          %v277 = vmul.f32 %v261, %v261
          %v278 = vmul.f32 %v262, %v262
          %v279 = vmul.f32 %v263, %v263
          %v280 = vmul.f32 %v264, %v264
          %v281 = vmul.f32 %v265, %v265
          %v282 = vmul.f32 %v266, %v266
          %v283 = vmul.f32 %v267, %v267
          %v284 = vmul.f32 %v268, %v268
          %v285 = vmul.f32 %v269, %v269
          %286 = vadd.xlane.f32.xlu0 %v270
          %v287 = vpop.xlane.xlu0 %286
          %288 = vadd.xlane.f32.xlu0 %v271
          %v289 = vpop.xlane.xlu0 %288
          %290 = vadd.xlane.f32.xlu0 %v272
          %v291 = vpop.xlane.xlu0 %290
          %292 = vadd.xlane.f32.xlu0 %v273
          %v293 = vpop.xlane.xlu0 %292
          %294 = vadd.xlane.f32.xlu0 %v274
          %v295 = vpop.xlane.xlu0 %294
          %296 = vadd.xlane.f32.xlu0 %v275
          %v297 = vpop.xlane.xlu0 %296
          %298 = vadd.xlane.f32.xlu0 %v276
          %v299 = vpop.xlane.xlu0 %298
          %300 = vadd.xlane.f32.xlu0 %v277
          %v301 = vpop.xlane.xlu0 %300
          %302 = vadd.xlane.f32.xlu0 %v278
          %v303 = vpop.xlane.xlu0 %302
          %304 = vadd.xlane.f32.xlu0 %v279
          %v305 = vpop.xlane.xlu0 %304
          %306 = vadd.xlane.f32.xlu0 %v280
          %v307 = vpop.xlane.xlu0 %306
          %308 = vadd.xlane.f32.xlu0 %v281
          %v309 = vpop.xlane.xlu0 %308
          %310 = vadd.xlane.f32.xlu0 %v282
          %v311 = vpop.xlane.xlu0 %310
          %312 = vadd.xlane.f32.xlu0 %v283
          %v313 = vpop.xlane.xlu0 %312
          %314 = vadd.xlane.f32.xlu0 %v284
          %v315 = vpop.xlane.xlu0 %314
          %316 = vadd.xlane.f32.xlu0 %v285
          %v317 = vpop.xlane.xlu0 %316
          %v318 = vrsqrt.pop %v287
          %v319 = vmul.f32 %v318, %v287
          %v320 = vmul.f32 %v319, %v318
          %v321 = vmul.f32 0.5, %v320
          %v322 = vsub.f32 1.5, %v321
          %v323 = vmul.f32 %v318, %v322
          %v324 = vmul.f32 %v287, %v323
          %vm325 = vcmp.eq.f32.partialorder %v287, inf
          %v326 = vsel %vm325, %v287, %v324
          %vm327 = vcmp.eq.f32.partialorder %v287, 0.0
          %v328 = vand.u32 %v287, 2147483648
          %v329 = vsel %vm327, %v328, %v326
          %v330 = vrsqrt.pop %v289
          %v331 = vmul.f32 %v330, %v289
          %v332 = vmul.f32 %v331, %v330
          %v333 = vmul.f32 0.5, %v332
          %v334 = vsub.f32 1.5, %v333
          %v335 = vmul.f32 %v330, %v334
          %v336 = vmul.f32 %v289, %v335
          %vm337 = vcmp.eq.f32.partialorder %v289, inf
          %v338 = vsel %vm337, %v289, %v336
          %vm339 = vcmp.eq.f32.partialorder %v289, 0.0
          %v340 = vand.u32 %v289, 2147483648
          %v341 = vsel %vm339, %v340, %v338
          %v342 = vrsqrt.pop %v291
          %v343 = vmul.f32 %v342, %v291
          %v344 = vmul.f32 %v343, %v342
          %v345 = vmul.f32 0.5, %v344
          %v346 = vsub.f32 1.5, %v345
          %v347 = vmul.f32 %v342, %v346
          %v348 = vmul.f32 %v291, %v347
          %vm349 = vcmp.eq.f32.partialorder %v291, inf
          %v350 = vsel %vm349, %v291, %v348
          %vm351 = vcmp.eq.f32.partialorder %v291, 0.0
          %v352 = vand.u32 %v291, 2147483648
          %v353 = vsel %vm351, %v352, %v350
          %v354 = vrsqrt.pop %v293
          %v355 = vmul.f32 %v354, %v293
          %v356 = vmul.f32 %v355, %v354
          %v357 = vmul.f32 0.5, %v356
          %v358 = vsub.f32 1.5, %v357
          %v359 = vmul.f32 %v354, %v358
          %v360 = vmul.f32 %v293, %v359
          %vm361 = vcmp.eq.f32.partialorder %v293, inf
          %v362 = vsel %vm361, %v293, %v360
          %vm363 = vcmp.eq.f32.partialorder %v293, 0.0
          %v364 = vand.u32 %v293, 2147483648
          %v365 = vsel %vm363, %v364, %v362
          %v366 = vrsqrt.pop %v295
          %v367 = vmul.f32 %v366, %v295
          %v368 = vmul.f32 %v367, %v366
          %v369 = vmul.f32 0.5, %v368
          %v370 = vsub.f32 1.5, %v369
          %v371 = vmul.f32 %v366, %v370
          %v372 = vmul.f32 %v295, %v371
          %vm373 = vcmp.eq.f32.partialorder %v295, inf
          %v374 = vsel %vm373, %v295, %v372
          %vm375 = vcmp.eq.f32.partialorder %v295, 0.0
          %v376 = vand.u32 %v295, 2147483648
          %v377 = vsel %vm375, %v376, %v374
          %v378 = vrsqrt.pop %v297
          %v379 = vmul.f32 %v378, %v297
          %v380 = vmul.f32 %v379, %v378
          %v381 = vmul.f32 0.5, %v380
          %v382 = vsub.f32 1.5, %v381
          %v383 = vmul.f32 %v378, %v382
          %v384 = vmul.f32 %v297, %v383
          %vm385 = vcmp.eq.f32.partialorder %v297, inf
          %v386 = vsel %vm385, %v297, %v384
          %vm387 = vcmp.eq.f32.partialorder %v297, 0.0
          %v388 = vand.u32 %v297, 2147483648
          %v389 = vsel %vm387, %v388, %v386
          %v390 = vrsqrt.pop %v299
          %v391 = vmul.f32 %v390, %v299
          %v392 = vmul.f32 %v391, %v390
          %v393 = vmul.f32 0.5, %v392
          %v394 = vsub.f32 1.5, %v393
          %v395 = vmul.f32 %v390, %v394
          %v396 = vmul.f32 %v299, %v395
          %vm397 = vcmp.eq.f32.partialorder %v299, inf
          %v398 = vsel %vm397, %v299, %v396
          %vm399 = vcmp.eq.f32.partialorder %v299, 0.0
          %v400 = vand.u32 %v299, 2147483648
          %v401 = vsel %vm399, %v400, %v398
          %v402 = vrsqrt.pop %v301
          %v403 = vmul.f32 %v402, %v301
          %v404 = vmul.f32 %v403, %v402
          %v405 = vmul.f32 0.5, %v404
          %v406 = vsub.f32 1.5, %v405
          %v407 = vmul.f32 %v402, %v406
          %v408 = vmul.f32 %v301, %v407
          %vm409 = vcmp.eq.f32.partialorder %v301, inf
          %v410 = vsel %vm409, %v301, %v408
          %vm411 = vcmp.eq.f32.partialorder %v301, 0.0
          %v412 = vand.u32 %v301, 2147483648
          %v413 = vsel %vm411, %v412, %v410
          %v414 = vrsqrt.pop %v303
          %v415 = vmul.f32 %v414, %v303
          %v416 = vmul.f32 %v415, %v414
          %v417 = vmul.f32 0.5, %v416
          %v418 = vsub.f32 1.5, %v417
          %v419 = vmul.f32 %v414, %v418
          %v420 = vmul.f32 %v303, %v419
          %vm421 = vcmp.eq.f32.partialorder %v303, inf
          %v422 = vsel %vm421, %v303, %v420
          %vm423 = vcmp.eq.f32.partialorder %v303, 0.0
          %v424 = vand.u32 %v303, 2147483648
          %v425 = vsel %vm423, %v424, %v422
          %v426 = vrsqrt.pop %v305
          %v427 = vmul.f32 %v426, %v305
          %v428 = vmul.f32 %v427, %v426
          %v429 = vmul.f32 0.5, %v428
          %v430 = vsub.f32 1.5, %v429
          %v431 = vmul.f32 %v426, %v430
          %v432 = vmul.f32 %v305, %v431
          %vm433 = vcmp.eq.f32.partialorder %v305, inf
          %v434 = vsel %vm433, %v305, %v432
          %vm435 = vcmp.eq.f32.partialorder %v305, 0.0
          %v436 = vand.u32 %v305, 2147483648
          %v437 = vsel %vm435, %v436, %v434
          %v438 = vrsqrt.pop %v307
          %v439 = vmul.f32 %v438, %v307
          %v440 = vmul.f32 %v439, %v438
          %v441 = vmul.f32 0.5, %v440
          %v442 = vsub.f32 1.5, %v441
          %v443 = vmul.f32 %v438, %v442
          %v444 = vmul.f32 %v307, %v443
          %vm445 = vcmp.eq.f32.partialorder %v307, inf
          %v446 = vsel %vm445, %v307, %v444
          %vm447 = vcmp.eq.f32.partialorder %v307, 0.0
          %v448 = vand.u32 %v307, 2147483648
          %v449 = vsel %vm447, %v448, %v446
          %v450 = vrsqrt.pop %v309
          %v451 = vmul.f32 %v450, %v309
          %v452 = vmul.f32 %v451, %v450
          %v453 = vmul.f32 0.5, %v452
          %v454 = vsub.f32 1.5, %v453
          %v455 = vmul.f32 %v450, %v454
          %v456 = vmul.f32 %v309, %v455
          %vm457 = vcmp.eq.f32.partialorder %v309, inf
          %v458 = vsel %vm457, %v309, %v456
          %vm459 = vcmp.eq.f32.partialorder %v309, 0.0
          %v460 = vand.u32 %v309, 2147483648
          %v461 = vsel %vm459, %v460, %v458
          %v462 = vrsqrt.pop %v311
          %v463 = vmul.f32 %v462, %v311
          %v464 = vmul.f32 %v463, %v462
          %v465 = vmul.f32 0.5, %v464
          %v466 = vsub.f32 1.5, %v465
          %v467 = vmul.f32 %v462, %v466
          %v468 = vmul.f32 %v311, %v467
          %vm469 = vcmp.eq.f32.partialorder %v311, inf
          %v470 = vsel %vm469, %v311, %v468
          %vm471 = vcmp.eq.f32.partialorder %v311, 0.0
          %v472 = vand.u32 %v311, 2147483648
          %v473 = vsel %vm471, %v472, %v470
          %v474 = vrsqrt.pop %v313
          %v475 = vmul.f32 %v474, %v313
          %v476 = vmul.f32 %v475, %v474
          %v477 = vmul.f32 0.5, %v476
          %v478 = vsub.f32 1.5, %v477
          %v479 = vmul.f32 %v474, %v478
          %v480 = vmul.f32 %v313, %v479
          %vm481 = vcmp.eq.f32.partialorder %v313, inf
          %v482 = vsel %vm481, %v313, %v480
          %vm483 = vcmp.eq.f32.partialorder %v313, 0.0
          %v484 = vand.u32 %v313, 2147483648
          %v485 = vsel %vm483, %v484, %v482
          %v486 = vrsqrt.pop %v315
          %v487 = vmul.f32 %v486, %v315
          %v488 = vmul.f32 %v487, %v486
          %v489 = vmul.f32 0.5, %v488
          %v490 = vsub.f32 1.5, %v489
          %v491 = vmul.f32 %v486, %v490
          %v492 = vmul.f32 %v315, %v491
          %vm493 = vcmp.eq.f32.partialorder %v315, inf
          %v494 = vsel %vm493, %v315, %v492
          %vm495 = vcmp.eq.f32.partialorder %v315, 0.0
          %v496 = vand.u32 %v315, 2147483648
          %v497 = vsel %vm495, %v496, %v494
          %v498 = vrsqrt.pop %v317
          %v499 = vmul.f32 %v498, %v317
          %v500 = vmul.f32 %v499, %v498
          %v501 = vmul.f32 0.5, %v500
          %v502 = vsub.f32 1.5, %v501
          %v503 = vmul.f32 %v498, %v502
          %v504 = vmul.f32 %v317, %v503
          %vm505 = vcmp.eq.f32.partialorder %v317, inf
          %v506 = vsel %vm505, %v317, %v504
          %vm507 = vcmp.eq.f32.partialorder %v317, 0.0
          %v508 = vand.u32 %v317, 2147483648
          %v509 = vsel %vm507, %v508, %v506
          %vm510 = vcmp.gt.f32.partialorder %v329, 1.0
          %vm511 = vcmp.gt.f32.partialorder %v341, 1.0
          %vm512 = vcmp.gt.f32.partialorder %v353, 1.0
          %vm513 = vcmp.gt.f32.partialorder %v365, 1.0
          %vm514 = vcmp.gt.f32.partialorder %v377, 1.0
          %vm515 = vcmp.gt.f32.partialorder %v389, 1.0
          %vm516 = vcmp.gt.f32.partialorder %v401, 1.0
          %vm517 = vcmp.gt.f32.partialorder %v413, 1.0
          %vm518 = vcmp.gt.f32.partialorder %v425, 1.0
          %vm519 = vcmp.gt.f32.partialorder %v437, 1.0
          %vm520 = vcmp.gt.f32.partialorder %v449, 1.0
          %vm521 = vcmp.gt.f32.partialorder %v461, 1.0
          %vm522 = vcmp.gt.f32.partialorder %v473, 1.0
          %vm523 = vcmp.gt.f32.partialorder %v485, 1.0
          %vm524 = vcmp.gt.f32.partialorder %v497, 1.0
          %vm525 = vcmp.gt.f32.partialorder %v509, 1.0
          %v526 = vadd.f32 %v329, 1e-07
          %v527 = vadd.f32 %v341, 1e-07
          %v528 = vadd.f32 %v353, 1e-07
          %v529 = vadd.f32 %v365, 1e-07
          %v530 = vadd.f32 %v377, 1e-07
          %v531 = vadd.f32 %v389, 1e-07
          %v532 = vadd.f32 %v401, 1e-07
          %v533 = vadd.f32 %v413, 1e-07
          %v534 = vadd.f32 %v425, 1e-07
          %v535 = vadd.f32 %v437, 1e-07
          %v536 = vadd.f32 %v449, 1e-07
          %v537 = vadd.f32 %v461, 1e-07
          %v538 = vadd.f32 %v473, 1e-07
          %v539 = vadd.f32 %v485, 1e-07
          %v540 = vadd.f32 %v497, 1e-07
          %v541 = vadd.f32 %v509, 1e-07
          %v542 = vrcp.pop %v526
          %v543 = vmul.f32 %v526, %v542
          %v544 = vsub.f32 1.0, %v543
          %v545 = vmul.f32 %v542, %v544
          %v546 = vadd.f32 %v542, %v545
          %vm547 = vweird.f32 %v526
          %vm548 = vweird.f32 %v542
          %vm549 = vmor %vm547, %vm548
          %v550 = vsel %vm549, %v542, %v546
          %v551 = vand.u32 2147483647, %v526
          %vm552 = vcmp.eq.f32.partialorder %v551, 8.507059e+37
          %v553 = vand.u32 %v526, 2147483648
          %v554 = vor.u32 1.1754944e-38, %v553
          %v555 = vsel %vm552, %v554, %v550
          %v556 = vmul.f32 1.0, %v555
          %v557 = vrcp.pop %v527
          %v558 = vmul.f32 %v527, %v557
          %v559 = vsub.f32 1.0, %v558
          %v560 = vmul.f32 %v557, %v559
          %v561 = vadd.f32 %v557, %v560
          %vm562 = vweird.f32 %v527
          %vm563 = vweird.f32 %v557
          %vm564 = vmor %vm562, %vm563
          %v565 = vsel %vm564, %v557, %v561
          %v566 = vand.u32 2147483647, %v527
          %vm567 = vcmp.eq.f32.partialorder %v566, 8.507059e+37
          %v568 = vand.u32 %v527, 2147483648
          %v569 = vor.u32 1.1754944e-38, %v568
          %v570 = vsel %vm567, %v569, %v565
          %v571 = vmul.f32 1.0, %v570
          %v572 = vrcp.pop %v528
          %v573 = vmul.f32 %v528, %v572
          %v574 = vsub.f32 1.0, %v573
          %v575 = vmul.f32 %v572, %v574
          %v576 = vadd.f32 %v572, %v575
          %vm577 = vweird.f32 %v528
          %vm578 = vweird.f32 %v572
          %vm579 = vmor %vm577, %vm578
          %v580 = vsel %vm579, %v572, %v576
          %v581 = vand.u32 2147483647, %v528
          %vm582 = vcmp.eq.f32.partialorder %v581, 8.507059e+37
          %v583 = vand.u32 %v528, 2147483648
          %v584 = vor.u32 1.1754944e-38, %v583
          %v585 = vsel %vm582, %v584, %v580
          %v586 = vmul.f32 1.0, %v585
          %v587 = vrcp.pop %v529
          %v588 = vmul.f32 %v529, %v587
          %v589 = vsub.f32 1.0, %v588
          %v590 = vmul.f32 %v587, %v589
          %v591 = vadd.f32 %v587, %v590
          %vm592 = vweird.f32 %v529
          %vm593 = vweird.f32 %v587
          %vm594 = vmor %vm592, %vm593
          %v595 = vsel %vm594, %v587, %v591
          %v596 = vand.u32 2147483647, %v529
          %vm597 = vcmp.eq.f32.partialorder %v596, 8.507059e+37
          %v598 = vand.u32 %v529, 2147483648
          %v599 = vor.u32 1.1754944e-38, %v598
          %v600 = vsel %vm597, %v599, %v595
          %v601 = vmul.f32 1.0, %v600
          %v602 = vrcp.pop %v530
          %v603 = vmul.f32 %v530, %v602
          %v604 = vsub.f32 1.0, %v603
          %v605 = vmul.f32 %v602, %v604
          %v606 = vadd.f32 %v602, %v605
          %vm607 = vweird.f32 %v530
          %vm608 = vweird.f32 %v602
          %vm609 = vmor %vm607, %vm608
          %v610 = vsel %vm609, %v602, %v606
          %v611 = vand.u32 2147483647, %v530
          %vm612 = vcmp.eq.f32.partialorder %v611, 8.507059e+37
          %v613 = vand.u32 %v530, 2147483648
          %v614 = vor.u32 1.1754944e-38, %v613
          %v615 = vsel %vm612, %v614, %v610
          %v616 = vmul.f32 1.0, %v615
          %v617 = vrcp.pop %v531
          %v618 = vmul.f32 %v531, %v617
          %v619 = vsub.f32 1.0, %v618
          %v620 = vmul.f32 %v617, %v619
          %v621 = vadd.f32 %v617, %v620
          %vm622 = vweird.f32 %v531
          %vm623 = vweird.f32 %v617
          %vm624 = vmor %vm622, %vm623
          %v625 = vsel %vm624, %v617, %v621
          %v626 = vand.u32 2147483647, %v531
          %vm627 = vcmp.eq.f32.partialorder %v626, 8.507059e+37
          %v628 = vand.u32 %v531, 2147483648
          %v629 = vor.u32 1.1754944e-38, %v628
          %v630 = vsel %vm627, %v629, %v625
          %v631 = vmul.f32 1.0, %v630
          %v632 = vrcp.pop %v532
          %v633 = vmul.f32 %v532, %v632
          %v634 = vsub.f32 1.0, %v633
          %v635 = vmul.f32 %v632, %v634
          %v636 = vadd.f32 %v632, %v635
          %vm637 = vweird.f32 %v532
          %vm638 = vweird.f32 %v632
          %vm639 = vmor %vm637, %vm638
          %v640 = vsel %vm639, %v632, %v636
          %v641 = vand.u32 2147483647, %v532
          %vm642 = vcmp.eq.f32.partialorder %v641, 8.507059e+37
          %v643 = vand.u32 %v532, 2147483648
          %v644 = vor.u32 1.1754944e-38, %v643
          %v645 = vsel %vm642, %v644, %v640
          %v646 = vmul.f32 1.0, %v645
          %v647 = vrcp.pop %v533
          %v648 = vmul.f32 %v533, %v647
          %v649 = vsub.f32 1.0, %v648
          %v650 = vmul.f32 %v647, %v649
          %v651 = vadd.f32 %v647, %v650
          %vm652 = vweird.f32 %v533
          %vm653 = vweird.f32 %v647
          %vm654 = vmor %vm652, %vm653
          %v655 = vsel %vm654, %v647, %v651
          %v656 = vand.u32 2147483647, %v533
          %vm657 = vcmp.eq.f32.partialorder %v656, 8.507059e+37
          %v658 = vand.u32 %v533, 2147483648
          %v659 = vor.u32 1.1754944e-38, %v658
          %v660 = vsel %vm657, %v659, %v655
          %v661 = vmul.f32 1.0, %v660
          %v662 = vrcp.pop %v534
          %v663 = vmul.f32 %v534, %v662
          %v664 = vsub.f32 1.0, %v663
          %v665 = vmul.f32 %v662, %v664
          %v666 = vadd.f32 %v662, %v665
          %vm667 = vweird.f32 %v534
          %vm668 = vweird.f32 %v662
          %vm669 = vmor %vm667, %vm668
          %v670 = vsel %vm669, %v662, %v666
          %v671 = vand.u32 2147483647, %v534
          %vm672 = vcmp.eq.f32.partialorder %v671, 8.507059e+37
          %v673 = vand.u32 %v534, 2147483648
          %v674 = vor.u32 1.1754944e-38, %v673
          %v675 = vsel %vm672, %v674, %v670
          %v676 = vmul.f32 1.0, %v675
          %v677 = vrcp.pop %v535
          %v678 = vmul.f32 %v535, %v677
          %v679 = vsub.f32 1.0, %v678
          %v680 = vmul.f32 %v677, %v679
          %v681 = vadd.f32 %v677, %v680
          %vm682 = vweird.f32 %v535
          %vm683 = vweird.f32 %v677
          %vm684 = vmor %vm682, %vm683
          %v685 = vsel %vm684, %v677, %v681
          %v686 = vand.u32 2147483647, %v535
          %vm687 = vcmp.eq.f32.partialorder %v686, 8.507059e+37
          %v688 = vand.u32 %v535, 2147483648
          %v689 = vor.u32 1.1754944e-38, %v688
          %v690 = vsel %vm687, %v689, %v685
          %v691 = vmul.f32 1.0, %v690
          %v692 = vrcp.pop %v536
          %v693 = vmul.f32 %v536, %v692
          %v694 = vsub.f32 1.0, %v693
          %v695 = vmul.f32 %v692, %v694
          %v696 = vadd.f32 %v692, %v695
          %vm697 = vweird.f32 %v536
          %vm698 = vweird.f32 %v692
          %vm699 = vmor %vm697, %vm698
          %v700 = vsel %vm699, %v692, %v696
          %v701 = vand.u32 2147483647, %v536
          %vm702 = vcmp.eq.f32.partialorder %v701, 8.507059e+37
          %v703 = vand.u32 %v536, 2147483648
          %v704 = vor.u32 1.1754944e-38, %v703
          %v705 = vsel %vm702, %v704, %v700
          %v706 = vmul.f32 1.0, %v705
          %v707 = vrcp.pop %v537
          %v708 = vmul.f32 %v537, %v707
          %v709 = vsub.f32 1.0, %v708
          %v710 = vmul.f32 %v707, %v709
          %v711 = vadd.f32 %v707, %v710
          %vm712 = vweird.f32 %v537
          %vm713 = vweird.f32 %v707
          %vm714 = vmor %vm712, %vm713
          %v715 = vsel %vm714, %v707, %v711
          %v716 = vand.u32 2147483647, %v537
          %vm717 = vcmp.eq.f32.partialorder %v716, 8.507059e+37
          %v718 = vand.u32 %v537, 2147483648
          %v719 = vor.u32 1.1754944e-38, %v718
          %v720 = vsel %vm717, %v719, %v715
          %v721 = vmul.f32 1.0, %v720
          %v722 = vrcp.pop %v538
          %v723 = vmul.f32 %v538, %v722
          %v724 = vsub.f32 1.0, %v723
          %v725 = vmul.f32 %v722, %v724
          %v726 = vadd.f32 %v722, %v725
          %vm727 = vweird.f32 %v538
          %vm728 = vweird.f32 %v722
          %vm729 = vmor %vm727, %vm728
          %v730 = vsel %vm729, %v722, %v726
          %v731 = vand.u32 2147483647, %v538
          %vm732 = vcmp.eq.f32.partialorder %v731, 8.507059e+37
          %v733 = vand.u32 %v538, 2147483648
          %v734 = vor.u32 1.1754944e-38, %v733
          %v735 = vsel %vm732, %v734, %v730
          %v736 = vmul.f32 1.0, %v735
          %v737 = vrcp.pop %v539
          %v738 = vmul.f32 %v539, %v737
          %v739 = vsub.f32 1.0, %v738
          %v740 = vmul.f32 %v737, %v739
          %v741 = vadd.f32 %v737, %v740
          %vm742 = vweird.f32 %v539
          %vm743 = vweird.f32 %v737
          %vm744 = vmor %vm742, %vm743
          %v745 = vsel %vm744, %v737, %v741
          %v746 = vand.u32 2147483647, %v539
          %vm747 = vcmp.eq.f32.partialorder %v746, 8.507059e+37
          %v748 = vand.u32 %v539, 2147483648
          %v749 = vor.u32 1.1754944e-38, %v748
          %v750 = vsel %vm747, %v749, %v745
          %v751 = vmul.f32 1.0, %v750
          %v752 = vrcp.pop %v540
          %v753 = vmul.f32 %v540, %v752
          %v754 = vsub.f32 1.0, %v753
          %v755 = vmul.f32 %v752, %v754
          %v756 = vadd.f32 %v752, %v755
          %vm757 = vweird.f32 %v540
          %vm758 = vweird.f32 %v752
          %vm759 = vmor %vm757, %vm758
          %v760 = vsel %vm759, %v752, %v756
          %v761 = vand.u32 2147483647, %v540
          %vm762 = vcmp.eq.f32.partialorder %v761, 8.507059e+37
          %v763 = vand.u32 %v540, 2147483648
          %v764 = vor.u32 1.1754944e-38, %v763
          %v765 = vsel %vm762, %v764, %v760
          %v766 = vmul.f32 1.0, %v765
          %v767 = vrcp.pop %v541
          %v768 = vmul.f32 %v541, %v767
          %v769 = vsub.f32 1.0, %v768
          %v770 = vmul.f32 %v767, %v769
          %v771 = vadd.f32 %v767, %v770
          %vm772 = vweird.f32 %v541
          %vm773 = vweird.f32 %v767
          %vm774 = vmor %vm772, %vm773
          %v775 = vsel %vm774, %v767, %v771
          %v776 = vand.u32 2147483647, %v541
          %vm777 = vcmp.eq.f32.partialorder %v776, 8.507059e+37
          %v778 = vand.u32 %v541, 2147483648
          %v779 = vor.u32 1.1754944e-38, %v778
          %v780 = vsel %vm777, %v779, %v775
          %v781 = vmul.f32 1.0, %v780
          %v782 = vsel %vm510, %v556, 1.0
          %v783 = vsel %vm511, %v571, 1.0
          %v784 = vsel %vm512, %v586, 1.0
          %v785 = vsel %vm513, %v601, 1.0
          %v786 = vsel %vm514, %v616, 1.0
          %v787 = vsel %vm515, %v631, 1.0
          %v788 = vsel %vm516, %v646, 1.0
          %v789 = vsel %vm517, %v661, 1.0
          %v790 = vsel %vm518, %v676, 1.0
          %v791 = vsel %vm519, %v691, 1.0
          %v792 = vsel %vm520, %v706, 1.0
          %v793 = vsel %vm521, %v721, 1.0
          %v794 = vsel %vm522, %v736, 1.0
          %v795 = vsel %vm523, %v751, 1.0
          %v796 = vsel %vm524, %v766, 1.0
          %v797 = vsel %vm525, %v781, 1.0
          %v798 = vmul.f32 %v254, %v782
          %v799 = vmul.f32 %v255, %v783
          %v800 = vmul.f32 %v256, %v784
          %v801 = vmul.f32 %v257, %v785
          %v802 = vmul.f32 %v258, %v786
          %v803 = vmul.f32 %v259, %v787
          %v804 = vmul.f32 %v260, %v788
          %v805 = vmul.f32 %v261, %v789
          %v806 = vmul.f32 %v262, %v790
          %v807 = vmul.f32 %v263, %v791
          %v808 = vmul.f32 %v264, %v792
          %v809 = vmul.f32 %v265, %v793
          %v810 = vmul.f32 %v266, %v794
          %v811 = vmul.f32 %v267, %v795
          %v812 = vmul.f32 %v268, %v796
          %v813 = vmul.f32 %v269, %v797
          %v814 = vpack.c.bf16 %v798, %v798
          %v815 = vpack.c.bf16 %v799, %v799
          %v816 = vpack.c.bf16 %v800, %v800
          %v817 = vpack.c.bf16 %v801, %v801
          %v818 = vpack.c.bf16 %v802, %v802
          %v819 = vpack.c.bf16 %v803, %v803
          %v820 = vpack.c.bf16 %v804, %v804
          %v821 = vpack.c.bf16 %v805, %v805
          %v822 = vpack.c.bf16 %v806, %v806
          %v823 = vpack.c.bf16 %v807, %v807
          %v824 = vpack.c.bf16 %v808, %v808
          %v825 = vpack.c.bf16 %v809, %v809
          %v826 = vpack.c.bf16 %v810, %v810
          %v827 = vpack.c.bf16 %v811, %v811
          %v828 = vpack.c.bf16 %v812, %v812
          %v829 = vpack.c.bf16 %v813, %v813
          %830 = vst [vmem:[#allocation3] sm:$0xf] %v814
          %831 = vst [vmem:[#allocation3 + $0x4] sm:$0xf] %v815
          %832 = vst [vmem:[#allocation3 + $0x8] sm:$0xf] %v816
          %833 = vst [vmem:[#allocation3 + $0xc] sm:$0xf] %v817
          %834 = vst [vmem:[#allocation3 + $0x10] sm:$0xf] %v818
          %835 = vst [vmem:[#allocation3 + $0x14] sm:$0xf] %v819
          %836 = vst [vmem:[#allocation3 + $0x18] sm:$0xf] %v820
          %837 = vst [vmem:[#allocation3 + $0x1c] sm:$0xf] %v821
          %838 = vst [vmem:[#allocation3 + $0x20] sm:$0xf] %v822
          %839 = vst [vmem:[#allocation3 + $0x24] sm:$0xf] %v823
          %840 = vst [vmem:[#allocation3 + $0x28] sm:$0xf] %v824
          %841 = vst [vmem:[#allocation3 + $0x2c] sm:$0xf] %v825
          %842 = vst [vmem:[#allocation3 + $0x30] sm:$0xf] %v826
          %843 = vst [vmem:[#allocation3 + $0x34] sm:$0xf] %v827
          %844 = vst [vmem:[#allocation3 + $0x38] sm:$0xf] %v828
          %845 = vst [vmem:[#allocation3 + $0x3c] sm:$0xf] %v829
        $region40: #{tpu_custom_call.1} parent=27 // pred_fallthru
          _
        %v846 = vld [vmem:[#allocation3] sm:$0xf]
        %v847 = vld [vmem:[#allocation3 + $0x4] sm:$0xf]
        %v848 = vld [vmem:[#allocation3 + $0x8] sm:$0xf]
        %v849 = vld [vmem:[#allocation3 + $0xc] sm:$0xf]
        %v850 = vld [vmem:[#allocation3 + $0x10] sm:$0xf]
        %v851 = vld [vmem:[#allocation3 + $0x14] sm:$0xf]
        %v852 = vld [vmem:[#allocation3 + $0x18] sm:$0xf]
        %v853 = vld [vmem:[#allocation3 + $0x1c] sm:$0xf]
        %v854 = vld [vmem:[#allocation3 + $0x20] sm:$0xf]
        %v855 = vld [vmem:[#allocation3 + $0x24] sm:$0xf]
        %v856 = vld [vmem:[#allocation3 + $0x28] sm:$0xf]
        %v857 = vld [vmem:[#allocation3 + $0x2c] sm:$0xf]
        %v858 = vld [vmem:[#allocation3 + $0x30] sm:$0xf]
        %v859 = vld [vmem:[#allocation3 + $0x34] sm:$0xf]
        %v860 = vld [vmem:[#allocation3 + $0x38] sm:$0xf]
        %v861 = vld [vmem:[#allocation3 + $0x3c] sm:$0xf]
        %v862 = vld [vmem:[%s176] sm:$0xff]
        %v863 = vld [vmem:[%s176 + $0x8] sm:$0xff]
        %v864 = vld [vmem:[%s176 + $0x10] sm:$0xff]
        %v865 = vld [vmem:[%s176 + $0x18] sm:$0xff]
        %v866 = vld [vmem:[%s176 + $0x20] sm:$0xff]
        %v867 = vld [vmem:[%s176 + $0x28] sm:$0xff]
        %v868 = vld [vmem:[%s176 + $0x30] sm:$0xff]
        %v869 = vld [vmem:[%s176 + $0x38] sm:$0xff]
        %v870 = vld [vmem:[%s176 + $0x40] sm:$0xff]
        %v871 = vld [vmem:[%s176 + $0x48] sm:$0xff]
        %v872 = vld [vmem:[%s176 + $0x50] sm:$0xff]
        %v873 = vld [vmem:[%s176 + $0x58] sm:$0xff]
        %v874 = vld [vmem:[%s176 + $0x60] sm:$0xff]
        %v875 = vld [vmem:[%s176 + $0x68] sm:$0xff]
        %v876 = vld [vmem:[%s176 + $0x70] sm:$0xff]
        %v877 = vld [vmem:[%s176 + $0x78] sm:$0xff]
        %v878 = vld [vmem:[%s186] sm:$0x3]
        %v880 = vperm.slane %v878, 0
        %v881 = vperm.slane %v878, 1
        %v900 = vunpack.c.l.b16 %v846
        %v901 = vunpack.c.l.b16 %v847
        %v902 = vunpack.c.l.b16 %v848
        %v903 = vunpack.c.l.b16 %v849
        %v904 = vunpack.c.l.b16 %v850
        %v905 = vunpack.c.l.b16 %v851
        %v906 = vunpack.c.l.b16 %v852
        %v907 = vunpack.c.l.b16 %v853
        %v908 = vunpack.c.l.b16 %v854
        %v909 = vunpack.c.l.b16 %v855
        %v910 = vunpack.c.l.b16 %v856
        %v911 = vunpack.c.l.b16 %v857
        %v912 = vunpack.c.l.b16 %v858
        %v913 = vunpack.c.l.b16 %v859
        %v914 = vunpack.c.l.b16 %v860
        %v915 = vunpack.c.l.b16 %v861
        %v916 = vpack.c.b16 %v901, %v900
        %v917 = vpack.c.b16 %v903, %v902
        %v918 = vpack.c.b16 %v905, %v904
        %v919 = vpack.c.b16 %v907, %v906
        %v920 = vpack.c.b16 %v909, %v908
        %v921 = vpack.c.b16 %v911, %v910
        %v922 = vpack.c.b16 %v913, %v912
        %v923 = vpack.c.b16 %v915, %v914
        %v948 = vunpack.c.l.b16 %v862
        %v949 = vunpack.c.h.b16 %v862
        %v950 = vunpack.c.l.b16 %v863
        %v951 = vunpack.c.h.b16 %v863
        %v952 = vunpack.c.l.b16 %v864
        %v953 = vunpack.c.h.b16 %v864
        %v954 = vunpack.c.l.b16 %v865
        %v955 = vunpack.c.h.b16 %v865
        %v956 = vunpack.c.l.b16 %v866
        %v957 = vunpack.c.h.b16 %v866
        %v958 = vunpack.c.l.b16 %v867
        %v959 = vunpack.c.h.b16 %v867
        %v960 = vunpack.c.l.b16 %v868
        %v961 = vunpack.c.h.b16 %v868
        %v962 = vunpack.c.l.b16 %v869
        %v963 = vunpack.c.h.b16 %v869
        %v964 = vunpack.c.l.b16 %v870
        %v965 = vunpack.c.h.b16 %v870
        %v966 = vunpack.c.l.b16 %v871
        %v967 = vunpack.c.h.b16 %v871
        %v968 = vunpack.c.l.b16 %v872
        %v969 = vunpack.c.h.b16 %v872
        %v970 = vunpack.c.l.b16 %v873
        %v971 = vunpack.c.h.b16 %v873
        %v972 = vunpack.c.l.b16 %v874
        %v973 = vunpack.c.h.b16 %v874
        %v974 = vunpack.c.l.b16 %v875
        %v975 = vunpack.c.h.b16 %v875
        %v976 = vunpack.c.l.b16 %v876
        %v977 = vunpack.c.h.b16 %v876
        %v978 = vunpack.c.l.b16 %v877
        %v979 = vunpack.c.h.b16 %v877
        %v980 = vpack.c.b16 %v950, %v948
        %v981 = vpack.c.b16 %v951, %v949
        %v982 = vpack.c.b16 %v954, %v952
        %v983 = vpack.c.b16 %v955, %v953
        %v984 = vpack.c.b16 %v958, %v956
        %v985 = vpack.c.b16 %v959, %v957
        %v986 = vpack.c.b16 %v962, %v960
        %v987 = vpack.c.b16 %v963, %v961
        %v988 = vpack.c.b16 %v966, %v964
        %v989 = vpack.c.b16 %v967, %v965
        %v990 = vpack.c.b16 %v970, %v968
        %v991 = vpack.c.b16 %v971, %v969
        %v992 = vpack.c.b16 %v974, %v972
        %v993 = vpack.c.b16 %v975, %v973
        %v994 = vpack.c.b16 %v978, %v976
        %v995 = vpack.c.b16 %v979, %v977
        %1012 = vmatpush.bf16.msra.mxu0 %v994
        %1013 = vmatpush.bf16.msra.mxu0 %v992
        %1014 = vmatpush.bf16.msra.mxu0 %v990
        %1015 = vmatpush.bf16.msra.mxu0 %v988
        %1016 = vmatpush.bf16.msra.mxu0 %v986
        %1017 = vmatpush.bf16.msra.mxu0 %v984
        %1018 = vmatpush.bf16.msra.mxu0 %v982
        %1019 = vmatpush.bf16.msra.mxu0 %v980
        %1020 = vmatmul.bf16.gmra.mxu0 %v916
        %v1021 = vpop.f32.mrf.mxu0
        %v1022 = vadd.f32 %v880, %v1021
        %v1023 = vpop.f32.mrf.mxu0
        %v1024 = vadd.f32 %v880, %v1023
        %1025 = vmatmul.bf16.gmra.mxu0 %v917
        %v1026 = vpop.f32.mrf.mxu0
        %v1027 = vadd.f32 %v880, %v1026
        %v1028 = vpop.f32.mrf.mxu0
        %v1029 = vadd.f32 %v880, %v1028
        %1030 = vmatmul.bf16.gmra.mxu0 %v918
        %v1031 = vpop.f32.mrf.mxu0
        %v1032 = vadd.f32 %v880, %v1031
        %v1033 = vpop.f32.mrf.mxu0
        %v1034 = vadd.f32 %v880, %v1033
        %1035 = vmatmul.bf16.gmra.mxu0 %v919
        %v1036 = vpop.f32.mrf.mxu0
        %v1037 = vadd.f32 %v880, %v1036
        %v1038 = vpop.f32.mrf.mxu0
        %v1039 = vadd.f32 %v880, %v1038
        %1040 = vmatmul.bf16.gmra.mxu0 %v920
        %v1041 = vpop.f32.mrf.mxu0
        %v1042 = vadd.f32 %v880, %v1041
        %v1043 = vpop.f32.mrf.mxu0
        %v1044 = vadd.f32 %v880, %v1043
        %1045 = vmatmul.bf16.gmra.mxu0 %v921
        %v1046 = vpop.f32.mrf.mxu0
        %v1047 = vadd.f32 %v880, %v1046
        %v1048 = vpop.f32.mrf.mxu0
        %v1049 = vadd.f32 %v880, %v1048
        %1050 = vmatmul.bf16.gmra.mxu0 %v922
        %v1051 = vpop.f32.mrf.mxu0
        %v1052 = vadd.f32 %v880, %v1051
        %v1053 = vpop.f32.mrf.mxu0
        %v1054 = vadd.f32 %v880, %v1053
        %1055 = vmatmul.bf16.gmra.mxu0 %v923
        %v1056 = vpop.f32.mrf.mxu0
        %v1057 = vadd.f32 %v880, %v1056
        %v1058 = vpop.f32.mrf.mxu0
        %v1059 = vadd.f32 %v880, %v1058
        %1060 = vdwg.mxu0
        %1061 = vmatpush.bf16.msra.mxu0 %v995
        %1062 = vmatpush.bf16.msra.mxu0 %v993
        %1063 = vmatpush.bf16.msra.mxu0 %v991
        %1064 = vmatpush.bf16.msra.mxu0 %v989
        %1065 = vmatpush.bf16.msra.mxu0 %v987
        %1066 = vmatpush.bf16.msra.mxu0 %v985
        %1067 = vmatpush.bf16.msra.mxu0 %v983
        %1068 = vmatpush.bf16.msra.mxu0 %v981
        %1069 = vmatmul.bf16.gmra.mxu0 %v916
        %v1070 = vpop.f32.mrf.mxu0
        %v1071 = vadd.f32 %v881, %v1070
        %v1072 = vpop.f32.mrf.mxu0
        %v1073 = vadd.f32 %v881, %v1072
        %1074 = vmatmul.bf16.gmra.mxu0 %v917
        %v1075 = vpop.f32.mrf.mxu0
        %v1076 = vadd.f32 %v881, %v1075
        %v1077 = vpop.f32.mrf.mxu0
        %v1078 = vadd.f32 %v881, %v1077
        %1079 = vmatmul.bf16.gmra.mxu0 %v918
        %v1080 = vpop.f32.mrf.mxu0
        %v1081 = vadd.f32 %v881, %v1080
        %v1082 = vpop.f32.mrf.mxu0
        %v1083 = vadd.f32 %v881, %v1082
        %1084 = vmatmul.bf16.gmra.mxu0 %v919
        %v1085 = vpop.f32.mrf.mxu0
        %v1086 = vadd.f32 %v881, %v1085
        %v1087 = vpop.f32.mrf.mxu0
        %v1088 = vadd.f32 %v881, %v1087
        %1089 = vmatmul.bf16.gmra.mxu0 %v920
        %v1090 = vpop.f32.mrf.mxu0
        %v1091 = vadd.f32 %v881, %v1090
        %v1092 = vpop.f32.mrf.mxu0
        %v1093 = vadd.f32 %v881, %v1092
        %1094 = vmatmul.bf16.gmra.mxu0 %v921
        %v1095 = vpop.f32.mrf.mxu0
        %v1096 = vadd.f32 %v881, %v1095
        %v1097 = vpop.f32.mrf.mxu0
        %v1098 = vadd.f32 %v881, %v1097
        %1099 = vmatmul.bf16.gmra.mxu0 %v922
        %v1100 = vpop.f32.mrf.mxu0
        %v1101 = vadd.f32 %v881, %v1100
        %v1102 = vpop.f32.mrf.mxu0
        %v1103 = vadd.f32 %v881, %v1102
        %1104 = vmatmul.bf16.gmra.mxu0 %v923
        %v1105 = vpop.f32.mrf.mxu0
        %v1106 = vadd.f32 %v881, %v1105
        %v1107 = vpop.f32.mrf.mxu0
        %v1108 = vadd.f32 %v881, %v1107
        %1109 = vdwg.mxu0
        %1110 = vst [vmem:[%s212] sm:$0xff] %v1022
        %1111 = vst [vmem:[%s212 + $0x8] sm:$0xff] %v1071
        %1112 = vst [vmem:[%s212 + $0x10] sm:$0xff] %v1024
        %1113 = vst [vmem:[%s212 + $0x18] sm:$0xff] %v1073
        %1114 = vst [vmem:[%s212 + $0x20] sm:$0xff] %v1027
        %1115 = vst [vmem:[%s212 + $0x28] sm:$0xff] %v1076
        %1116 = vst [vmem:[%s212 + $0x30] sm:$0xff] %v1029
        %1117 = vst [vmem:[%s212 + $0x38] sm:$0xff] %v1078
        %1118 = vst [vmem:[%s212 + $0x40] sm:$0xff] %v1032
        %1119 = vst [vmem:[%s212 + $0x48] sm:$0xff] %v1081
        %1120 = vst [vmem:[%s212 + $0x50] sm:$0xff] %v1034
        %1121 = vst [vmem:[%s212 + $0x58] sm:$0xff] %v1083
        %1122 = vst [vmem:[%s212 + $0x60] sm:$0xff] %v1037
        %1123 = vst [vmem:[%s212 + $0x68] sm:$0xff] %v1086
        %1124 = vst [vmem:[%s212 + $0x70] sm:$0xff] %v1039
        %1125 = vst [vmem:[%s212 + $0x78] sm:$0xff] %v1088
        %1126 = vst [vmem:[%s212 + $0x80] sm:$0xff] %v1042
        %1127 = vst [vmem:[%s212 + $0x88] sm:$0xff] %v1091
        %1128 = vst [vmem:[%s212 + $0x90] sm:$0xff] %v1044
        %1129 = vst [vmem:[%s212 + $0x98] sm:$0xff] %v1093
        %1130 = vst [vmem:[%s212 + $0xa0] sm:$0xff] %v1047
        %1131 = vst [vmem:[%s212 + $0xa8] sm:$0xff] %v1096
        %1132 = vst [vmem:[%s212 + $0xb0] sm:$0xff] %v1049
        %1133 = vst [vmem:[%s212 + $0xb8] sm:$0xff] %v1098
        %1134 = vst [vmem:[%s212 + $0xc0] sm:$0xff] %v1052
        %1135 = vst [vmem:[%s212 + $0xc8] sm:$0xff] %v1101
        %1136 = vst [vmem:[%s212 + $0xd0] sm:$0xff] %v1054
        %1137 = vst [vmem:[%s212 + $0xd8] sm:$0xff] %v1103
        %1138 = vst [vmem:[%s212 + $0xe0] sm:$0xff] %v1057
        %1139 = vst [vmem:[%s212 + $0xe8] sm:$0xff] %v1106
        %1140 = vst [vmem:[%s212 + $0xf0] sm:$0xff] %v1059
        %1141 = vst [vmem:[%s212 + $0xf8] sm:$0xff] %v1108
        %s1142 = sand.u32 %s92, 1
        %s1143 = scalar_lea.sflag [#allocation9], %s1142
        %s1144 = sand.u32 %s92, 1
        %s1145 = smul.addr %s1144, 256
        %s1146 = scalar_lea.vmem [#allocation12], %s1145
        // Predicated region
        $region59: #{tpu_custom_call.1} parent=27 // pred_check
          %p1147 = pneg %p102
        $region60: #{tpu_custom_call.1} parent=27 // pred_check_branch
          %1149 = sbr.rel (%p1147) target = $region62
        $region61: #{tpu_custom_call.1} parent=27 // pred_region
          %s1150 = smul.u32 2, %s32
          %1152 = vsyncadd %s1143, 0
          %s1153 = smul.addr %s1150, 8
          %s1154 = scalar_lea.hbm %s4, %s1153
          %s1155 = sshll.u32 %s1146, 4
          %s1156 = int_to_ptr.vmem [resolvable:$true] %s1155
          %s1157 = sshll.u32 %s1154, 4
          %s1158 = int_to_ptr.hbm [resolvable:$true] %s1157
          %1163 = dma.vmem_to_hbm [thread:$0]  %s1156, 4096, %s1158, %s1143, 256, 512, 16
        $region62: #{tpu_custom_call.1} parent=27 // pred_fallthru
          _
      $region28: #{tpu_custom_call.1} parent=5 // pred_fallthru
        _
      %p1164 = scmp.le.s32.totalorder 2, %s27
      // Predicated region
      $region63: #{tpu_custom_call.1} parent=5 // pred_check
        %p1165 = pneg %p1164
      $region64: #{tpu_custom_call.1} parent=5 // pred_check_branch
        %1167 = sbr.rel (%p1165) target = $region66
      $region65: #{tpu_custom_call.1} parent=5 // pred_region
        %s1168 = ssub.s32 %s27, 2
        // Predicated region
        $region67: #{tpu_custom_call.1} parent=65 // pred_check
          %p1169 = pneg %p108
        $region68: #{tpu_custom_call.1} parent=65 // pred_check_branch
          %1171 = sbr.rel (%p1169) target = $region70
        $region69: #{tpu_custom_call.1} parent=65 // pred_region
          %s1172 = sand.u32 %s93, 1
          %s1173 = scalar_lea.sflag [#allocation9], %s1172
          %s1174 = sand.u32 %s93, 1
          %s1175 = smul.addr %s1174, 256
          %s1176 = scalar_lea.vmem [#allocation12], %s1175
          %1178 = dma.done %s1173, 4096
        $region70: #{tpu_custom_call.1} parent=65 // pred_fallthru
          _
      $region66: #{tpu_custom_call.1} parent=5 // pred_fallthru
        _
    $region6: #{tpu_custom_call.1} parent=1 // loop_footer
      %s31 = sadd.s32 1, %s27
    $region7: #{tpu_custom_call.1} parent=1 // loop_footer_branch
      %26 = sbr.rel target = $region3
    $region8: #{tpu_custom_call.1} parent=1 // loop_exit
      _
    %1179 = vsyncpa [#allocation8], 1
    %s1180 = scalar_lea.sflag [#allocation8], 1
    %1181 = vsyncpa %s1180, 1
    %1182 = vsyncpa [#allocation11], 1
    %s1183 = scalar_lea.sflag [#allocation11], 1
    %1184 = vsyncpa %s1183, 1
    %1185 = vsyncpa [#allocation9], 1
    %s1186 = scalar_lea.sflag [#allocation9], 1
    %1187 = vsyncpa %s1186, 1
  %1188 = vsyncmov [#allocation4]
  %s1189 = vpop.sfrf %1188
  %p1190 = scmp.eq.s32.totalorder %s1189, 0
  %p1191 = pneg %p1190
  %1193 = shalt.err (%p1191)
  %s1194 = scalar_lea.sflag [#allocation4], 1
  %1195 = vsyncmov %s1194
  %s1196 = vpop.sfrf %1195
  %p1197 = scmp.eq.s32.totalorder %s1196, 0
  %p1198 = pneg %p1197
  %1200 = shalt.err (%p1198)
  %s1201 = scalar_lea.sflag [#allocation4], 2
  %1202 = vsyncmov %s1201
  %s1203 = vpop.sfrf %1202
  %p1204 = scmp.eq.s32.totalorder %s1203, 0
  %p1205 = pneg %p1204
  %1207 = shalt.err (%p1205)
  %s1208 = scalar_lea.sflag [#allocation4], 3
  %1209 = vsyncmov %s1208
  %s1210 = vpop.sfrf %1209
  %p1211 = scmp.eq.s32.totalorder %s1210, 0
  %p1212 = pneg %p1211
  %1214 = shalt.err (%p1212)
  %s1215 = scalar_lea.sflag [#allocation4], 4
  %1216 = vsyncmov %s1215
  %s1217 = vpop.sfrf %1216
  %p1218 = scmp.eq.s32.totalorder %s1217, 0
  %p1219 = pneg %p1218
  %1221 = shalt.err (%p1219)
  %s1222 = scalar_lea.sflag [#allocation4], 5
  %1223 = vsyncmov %s1222
  %s1224 = vpop.sfrf %1223
  %p1225 = scmp.eq.s32.totalorder %s1224, 0
  %p1226 = pneg %p1225
  %1228 = shalt.err (%p1226)
  %s1229 = scalar_lea.sflag [#allocation4], 6
  %1230 = vsyncmov %s1229
  %s1231 = vpop.sfrf %1230
  %p1232 = scmp.eq.s32.totalorder %s1231, 0
  %p1233 = pneg %p1232
  %1235 = shalt.err (%p1233)
  %s1236 = scalar_lea.sflag [#allocation4], 7
  %1237 = vsyncmov %s1236
  %s1238 = vpop.sfrf %1237
  %p1239 = scmp.eq.s32.totalorder %s1238, 0
  %p1240 = pneg %p1239
  %1242 = shalt.err (%p1240)
  %s1243 = scalar_lea.sflag [#allocation4], 8
  %1244 = vsyncmov %s1243
  %s1245 = vpop.sfrf %1244
  %p1246 = scmp.eq.s32.totalorder %s1245, 0
  %p1247 = pneg %p1246
  %1249 = shalt.err (%p1247)
  %s1250 = scalar_lea.sflag [#allocation4], 9
  %1251 = vsyncmov %s1250
  %s1252 = vpop.sfrf %1251
  %p1253 = scmp.eq.s32.totalorder %s1252, 0
  %p1254 = pneg %p1253
  %1256 = shalt.err (%p1254)
  %s1257 = scalar_lea.sflag [#allocation4], 10
  %1258 = vsyncmov %s1257
  %s1259 = vpop.sfrf %1258
  %p1260 = scmp.eq.s32.totalorder %s1259, 0
  %p1261 = pneg %p1260
  %1263 = shalt.err (%p1261)
  %s1264 = scalar_lea.sflag [#allocation4], 11
  %1265 = vsyncmov %s1264
  %s1266 = vpop.sfrf %1265
  %p1267 = scmp.eq.s32.totalorder %s1266, 0
  %p1268 = pneg %p1267
  %1270 = shalt.err (%p1268)
  %s1271 = scalar_lea.sflag [#allocation4], 12
  %1272 = vsyncmov %s1271
  %s1273 = vpop.sfrf %1272
  %p1274 = scmp.eq.s32.totalorder %s1273, 0
  %p1275 = pneg %p1274
  %1277 = shalt.err (%p1275)
  %s1278 = scalar_lea.sflag [#allocation4], 13
  %1279 = vsyncmov %s1278
  %s1280 = vpop.sfrf %1279
  %p1281 = scmp.eq.s32.totalorder %s1280, 0
  %p1282 = pneg %p1281
  %1284 = shalt.err (%p1282)
  %s1285 = scalar_lea.sflag [#allocation4], 14
  %1286 = vsyncmov %s1285
  %s1287 = vpop.sfrf %1286
  %p1288 = scmp.eq.s32.totalorder %s1287, 0
  %p1289 = pneg %p1288
  %1291 = shalt.err (%p1289)
  %s1292 = scalar_lea.sflag [#allocation4], 15
  %1293 = vsyncmov %s1292
  %s1294 = vpop.sfrf %1293
  %p1295 = scmp.eq.s32.totalorder %s1294, 0
  %p1296 = pneg %p1295
  %1298 = shalt.err (%p1296)
  %s1299 = scalar_lea.sflag [#allocation4], 16
  %1300 = vsyncmov %s1299
  %s1301 = vpop.sfrf %1300
  %p1302 = scmp.eq.s32.totalorder %s1301, 0
  %p1303 = pneg %p1302
  %1305 = shalt.err (%p1303)
  %s1306 = scalar_lea.sflag [#allocation4], 17
  %1307 = vsyncmov %s1306
  %s1308 = vpop.sfrf %1307
  %p1309 = scmp.eq.s32.totalorder %s1308, 0
  %p1310 = pneg %p1309
  %1312 = shalt.err (%p1310)
  %s1313 = scalar_lea.sflag [#allocation4], 18
  %1314 = vsyncmov %s1313
  %s1315 = vpop.sfrf %1314
  %p1316 = scmp.eq.s32.totalorder %s1315, 0
  %p1317 = pneg %p1316
  %1319 = shalt.err (%p1317)
  %s1320 = scalar_lea.sflag [#allocation4], 19
  %1321 = vsyncmov %s1320
  %s1322 = vpop.sfrf %1321
  %p1323 = scmp.eq.s32.totalorder %s1322, 0
  %p1324 = pneg %p1323
  %1326 = shalt.err (%p1324)
  %s1327 = scalar_lea.sflag [#allocation4], 20
  %1328 = vsyncmov %s1327
  %s1329 = vpop.sfrf %1328
  %p1330 = scmp.eq.s32.totalorder %s1329, 0
  %p1331 = pneg %p1330
  %1333 = shalt.err (%p1331)
  %s1334 = scalar_lea.sflag [#allocation4], 21
  %1335 = vsyncmov %s1334
  %s1336 = vpop.sfrf %1335
  %p1337 = scmp.eq.s32.totalorder %s1336, 0
  %p1338 = pneg %p1337
  %1340 = shalt.err (%p1338)
  %s1341 = scalar_lea.sflag [#allocation4], 22
  %1342 = vsyncmov %s1341
  %s1343 = vpop.sfrf %1342
  %p1344 = scmp.eq.s32.totalorder %s1343, 0
  %p1345 = pneg %p1344
  %1347 = shalt.err (%p1345)
  %s1348 = scalar_lea.sflag [#allocation4], 23
  %1349 = vsyncmov %s1348
  %s1350 = vpop.sfrf %1349
  %p1351 = scmp.eq.s32.totalorder %s1350, 0
  %p1352 = pneg %p1351
  %1354 = shalt.err (%p1352)
  %s1355 = scalar_lea.sflag [#allocation4], 24
  %1356 = vsyncmov %s1355
  %s1357 = vpop.sfrf %1356
  %p1358 = scmp.eq.s32.totalorder %s1357, 0
  %p1359 = pneg %p1358
  %1361 = shalt.err (%p1359)
  %s1362 = scalar_lea.sflag [#allocation4], 25
  %1363 = vsyncmov %s1362
  %s1364 = vpop.sfrf %1363
  %p1365 = scmp.eq.s32.totalorder %s1364, 0
  %p1366 = pneg %p1365
  %1368 = shalt.err (%p1366)
  %s1369 = scalar_lea.sflag [#allocation4], 26
  %1370 = vsyncmov %s1369
  %s1371 = vpop.sfrf %1370
  %p1372 = scmp.eq.s32.totalorder %s1371, 0
  %p1373 = pneg %p1372
  %1375 = shalt.err (%p1373)
  %s1376 = scalar_lea.sflag [#allocation4], 27
  %1377 = vsyncmov %s1376
  %s1378 = vpop.sfrf %1377
  %p1379 = scmp.eq.s32.totalorder %s1378, 0
  %p1380 = pneg %p1379
  %1382 = shalt.err (%p1380)
  %s1383 = scalar_lea.sflag [#allocation4], 28
  %1384 = vsyncmov %s1383
  %s1385 = vpop.sfrf %1384
  %p1386 = scmp.eq.s32.totalorder %s1385, 0
  %p1387 = pneg %p1386
  %1389 = shalt.err (%p1387)
  %s1390 = scalar_lea.sflag [#allocation4], 29
  %1391 = vsyncmov %s1390
  %s1392 = vpop.sfrf %1391
  %p1393 = scmp.eq.s32.totalorder %s1392, 0
  %p1394 = pneg %p1393
  %1396 = shalt.err (%p1394)
  %s1397 = scalar_lea.sflag [#allocation4], 30
  %1398 = vsyncmov %s1397
  %s1399 = vpop.sfrf %1398
  %p1400 = scmp.eq.s32.totalorder %s1399, 0
  %p1401 = pneg %p1400
  %1403 = shalt.err (%p1401)
  %s1404 = scalar_lea.sflag [#allocation4], 31
  %1405 = vsyncmov %s1404
  %s1406 = vpop.sfrf %1405
  %p1407 = scmp.eq.s32.totalorder %s1406, 0
  %p1408 = pneg %p1407
  %1410 = shalt.err (%p1408)
  %s1411 = scalar_lea.sflag [#allocation4], 32
  %1412 = vsyncmov %s1411
  %s1413 = vpop.sfrf %1412
  %p1414 = scmp.eq.s32.totalorder %s1413, 0
  %p1415 = pneg %p1414
  %1417 = shalt.err (%p1415)
  %s1418 = scalar_lea.sflag [#allocation4], 33
  %1419 = vsyncmov %s1418
  %s1420 = vpop.sfrf %1419
  %p1421 = scmp.eq.s32.totalorder %s1420, 0
  %p1422 = pneg %p1421
  %1424 = shalt.err (%p1422)
  %s1425 = scalar_lea.sflag [#allocation4], 34
  %1426 = vsyncmov %s1425
  %s1427 = vpop.sfrf %1426
  %p1428 = scmp.eq.s32.totalorder %s1427, 0
  %p1429 = pneg %p1428
  %1431 = shalt.err (%p1429)
  %s1432 = scalar_lea.sflag [#allocation4], 35
  %1433 = vsyncmov %s1432
  %s1434 = vpop.sfrf %1433
  %p1435 = scmp.eq.s32.totalorder %s1434, 0
  %p1436 = pneg %p1435
  %1438 = shalt.err (%p1436)
  %s1439 = scalar_lea.sflag [#allocation4], 36
  %1440 = vsyncmov %s1439
  %s1441 = vpop.sfrf %1440
  %p1442 = scmp.eq.s32.totalorder %s1441, 0
  %p1443 = pneg %p1442
  %1445 = shalt.err (%p1443)
  %s1446 = scalar_lea.sflag [#allocation4], 37
  %1447 = vsyncmov %s1446
  %s1448 = vpop.sfrf %1447
  %p1449 = scmp.eq.s32.totalorder %s1448, 0
  %p1450 = pneg %p1449
  %1452 = shalt.err (%p1450)
  %s1453 = scalar_lea.sflag [#allocation4], 38
  %1454 = vsyncmov %s1453
  %s1455 = vpop.sfrf %1454
  %p1456 = scmp.eq.s32.totalorder %s1455, 0
  %p1457 = pneg %p1456
  %1459 = shalt.err (%p1457)
  %s1460 = scalar_lea.sflag [#allocation4], 39
  %1461 = vsyncmov %s1460
  %s1462 = vpop.sfrf %1461
  %p1463 = scmp.eq.s32.totalorder %s1462, 0
  %p1464 = pneg %p1463
  %1466 = shalt.err (%p1464)
  %s1467 = scalar_lea.sflag [#allocation4], 40
  %1468 = vsyncmov %s1467
  %s1469 = vpop.sfrf %1468
  %p1470 = scmp.eq.s32.totalorder %s1469, 0
  %p1471 = pneg %p1470
  %1473 = shalt.err (%p1471)
  %s1474 = scalar_lea.sflag [#allocation4], 41
  %1475 = vsyncmov %s1474
  %s1476 = vpop.sfrf %1475
  %p1477 = scmp.eq.s32.totalorder %s1476, 0
  %p1478 = pneg %p1477
  %1480 = shalt.err (%p1478)
  %s1481 = scalar_lea.sflag [#allocation4], 42
  %1482 = vsyncmov %s1481
  %s1483 = vpop.sfrf %1482
  %p1484 = scmp.eq.s32.totalorder %s1483, 0
  %p1485 = pneg %p1484
  %1487 = shalt.err (%p1485)
  %s1488 = scalar_lea.sflag [#allocation4], 43
  %1489 = vsyncmov %s1488
  %s1490 = vpop.sfrf %1489
  %p1491 = scmp.eq.s32.totalorder %s1490, 0
  %p1492 = pneg %p1491
  %1494 = shalt.err (%p1492)
  %s1495 = scalar_lea.sflag [#allocation4], 44
  %1496 = vsyncmov %s1495
  %s1497 = vpop.sfrf %1496
  %p1498 = scmp.eq.s32.totalorder %s1497, 0
  %p1499 = pneg %p1498
  %1501 = shalt.err (%p1499)
  %s1502 = scalar_lea.sflag [#allocation4], 45
  %1503 = vsyncmov %s1502
  %s1504 = vpop.sfrf %1503
  %p1505 = scmp.eq.s32.totalorder %s1504, 0
  %p1506 = pneg %p1505
  %1508 = shalt.err (%p1506)
  %s1509 = scalar_lea.sflag [#allocation4], 46
  %1510 = vsyncmov %s1509
  %s1511 = vpop.sfrf %1510
  %p1512 = scmp.eq.s32.totalorder %s1511, 0
  %p1513 = pneg %p1512
  %1515 = shalt.err (%p1513)
  %s1516 = scalar_lea.sflag [#allocation4], 47
  %1517 = vsyncmov %s1516
  %s1518 = vpop.sfrf %1517
  %p1519 = scmp.eq.s32.totalorder %s1518, 0
  %p1520 = pneg %p1519
  %1522 = shalt.err (%p1520)
  %s1523 = scalar_lea.sflag [#allocation4], 48
  %1524 = vsyncmov %s1523
  %s1525 = vpop.sfrf %1524
  %p1526 = scmp.eq.s32.totalorder %s1525, 0
  %p1527 = pneg %p1526
  %1529 = shalt.err (%p1527)
  %s1530 = scalar_lea.sflag [#allocation4], 49
  %1531 = vsyncmov %s1530
  %s1532 = vpop.sfrf %1531
  %p1533 = scmp.eq.s32.totalorder %s1532, 0
  %p1534 = pneg %p1533
  %1536 = shalt.err (%p1534)
  %s1537 = scalar_lea.sflag [#allocation4], 50
  %1538 = vsyncmov %s1537
  %s1539 = vpop.sfrf %1538
  %p1540 = scmp.eq.s32.totalorder %s1539, 0
  %p1541 = pneg %p1540
  %1543 = shalt.err (%p1541)
  %s1544 = scalar_lea.sflag [#allocation4], 51
  %1545 = vsyncmov %s1544
  %s1546 = vpop.sfrf %1545
  %p1547 = scmp.eq.s32.totalorder %s1546, 0
  %p1548 = pneg %p1547
  %1550 = shalt.err (%p1548)
  %s1551 = scalar_lea.sflag [#allocation4], 52
  %1552 = vsyncmov %s1551
  %s1553 = vpop.sfrf %1552
  %p1554 = scmp.eq.s32.totalorder %s1553, 0
  %p1555 = pneg %p1554
  %1557 = shalt.err (%p1555)
  %s1558 = scalar_lea.sflag [#allocation4], 53
  %1559 = vsyncmov %s1558
  %s1560 = vpop.sfrf %1559
  %p1561 = scmp.eq.s32.totalorder %s1560, 0
  %p1562 = pneg %p1561
  %1564 = shalt.err (%p1562)
  %s1565 = scalar_lea.sflag [#allocation4], 54
  %1566 = vsyncmov %s1565
  %s1567 = vpop.sfrf %1566
  %p1568 = scmp.eq.s32.totalorder %s1567, 0
  %p1569 = pneg %p1568
  %1571 = shalt.err (%p1569)
  %s1572 = scalar_lea.sflag [#allocation4], 55
  %1573 = vsyncmov %s1572
  %s1574 = vpop.sfrf %1573
  %p1575 = scmp.eq.s32.totalorder %s1574, 0
  %p1576 = pneg %p1575
  %1578 = shalt.err (%p1576)
  %s1579 = scalar_lea.sflag [#allocation4], 56
  %1580 = vsyncmov %s1579
  %s1581 = vpop.sfrf %1580
  %p1582 = scmp.eq.s32.totalorder %s1581, 0
  %p1583 = pneg %p1582
  %1585 = shalt.err (%p1583)
  %s1586 = scalar_lea.sflag [#allocation4], 57
  %1587 = vsyncmov %s1586
  %s1588 = vpop.sfrf %1587
  %p1589 = scmp.eq.s32.totalorder %s1588, 0
  %p1590 = pneg %p1589
  %1592 = shalt.err (%p1590)
  %s1593 = scalar_lea.sflag [#allocation4], 58
  %1594 = vsyncmov %s1593
  %s1595 = vpop.sfrf %1594
  %p1596 = scmp.eq.s32.totalorder %s1595, 0
  %p1597 = pneg %p1596
  %1599 = shalt.err (%p1597)
  %s1600 = scalar_lea.sflag [#allocation4], 59
  %1601 = vsyncmov %s1600
  %s1602 = vpop.sfrf %1601
  %p1603 = scmp.eq.s32.totalorder %s1602, 0
  %p1604 = pneg %p1603
  %1606 = shalt.err (%p1604)
  %s1607 = scalar_lea.sflag [#allocation4], 60
  %1608 = vsyncmov %s1607
  %s1609 = vpop.sfrf %1608
  %p1610 = scmp.eq.s32.totalorder %s1609, 0
  %p1611 = pneg %p1610
  %1613 = shalt.err (%p1611)
  %s1614 = scalar_lea.sflag [#allocation4], 61
  %1615 = vsyncmov %s1614
  %s1616 = vpop.sfrf %1615
  %p1617 = scmp.eq.s32.totalorder %s1616, 0
  %p1618 = pneg %p1617
  %1620 = shalt.err (%p1618)
  %s1621 = scalar_lea.sflag [#allocation4], 62
  %1622 = vsyncmov %s1621
  %s1623 = vpop.sfrf %1622
  %p1624 = scmp.eq.s32.totalorder %s1623, 0
  %p1625 = pneg %p1624
  %1627 = shalt.err (%p1625)
  %s1628 = scalar_lea.sflag [#allocation4], 63
  %1629 = vsyncmov %s1628
  %s1630 = vpop.sfrf %1629
  %p1631 = scmp.eq.s32.totalorder %s1630, 0
  %p1632 = pneg %p1631
  %1634 = shalt.err (%p1632)
  %s1635 = scalar_lea.sflag [#allocation4], 64
  %1636 = vsyncmov %s1635
  %s1637 = vpop.sfrf %1636
  %p1638 = scmp.eq.s32.totalorder %s1637, 0
  %p1639 = pneg %p1638
  %1641 = shalt.err (%p1639)
  %s1642 = scalar_lea.sflag [#allocation4], 65
  %1643 = vsyncmov %s1642
  %s1644 = vpop.sfrf %1643
  %p1645 = scmp.eq.s32.totalorder %s1644, 0
  %p1646 = pneg %p1645
  %1648 = shalt.err (%p1646)
  %s1649 = scalar_lea.sflag [#allocation4], 66
  %1650 = vsyncmov %s1649
  %s1651 = vpop.sfrf %1650
  %p1652 = scmp.eq.s32.totalorder %s1651, 0
  %p1653 = pneg %p1652
  %1655 = shalt.err (%p1653)
  %s1656 = scalar_lea.sflag [#allocation4], 67
  %1657 = vsyncmov %s1656
  %s1658 = vpop.sfrf %1657
  %p1659 = scmp.eq.s32.totalorder %s1658, 0
  %p1660 = pneg %p1659
  %1662 = shalt.err (%p1660)
  %s1663 = scalar_lea.sflag [#allocation4], 68
  %1664 = vsyncmov %s1663
  %s1665 = vpop.sfrf %1664
  %p1666 = scmp.eq.s32.totalorder %s1665, 0
  %p1667 = pneg %p1666
  %1669 = shalt.err (%p1667)
  %s1670 = scalar_lea.sflag [#allocation4], 69
  %1671 = vsyncmov %s1670
  %s1672 = vpop.sfrf %1671
  %p1673 = scmp.eq.s32.totalorder %s1672, 0
  %p1674 = pneg %p1673
  %1676 = shalt.err (%p1674)
  %s1677 = scalar_lea.sflag [#allocation4], 70
  %1678 = vsyncmov %s1677
  %s1679 = vpop.sfrf %1678
  %p1680 = scmp.eq.s32.totalorder %s1679, 0
  %p1681 = pneg %p1680
  %1683 = shalt.err (%p1681)
  %s1684 = scalar_lea.sflag [#allocation4], 71
  %1685 = vsyncmov %s1684
  %s1686 = vpop.sfrf %1685
  %p1687 = scmp.eq.s32.totalorder %s1686, 0
  %p1688 = pneg %p1687
  %1690 = shalt.err (%p1688)
  %s1691 = scalar_lea.sflag [#allocation4], 72
  %1692 = vsyncmov %s1691
  %s1693 = vpop.sfrf %1692
  %p1694 = scmp.eq.s32.totalorder %s1693, 0
  %p1695 = pneg %p1694
  %1697 = shalt.err (%p1695)
  %s1698 = scalar_lea.sflag [#allocation4], 73
  %1699 = vsyncmov %s1698
  %s1700 = vpop.sfrf %1699
  %p1701 = scmp.eq.s32.totalorder %s1700, 0
  %p1702 = pneg %p1701
  %1704 = shalt.err (%p1702)
  %s1705 = scalar_lea.sflag [#allocation4], 74
  %1706 = vsyncmov %s1705
  %s1707 = vpop.sfrf %1706
  %p1708 = scmp.eq.s32.totalorder %s1707, 0
  %p1709 = pneg %p1708
  %1711 = shalt.err (%p1709)
  %s1712 = scalar_lea.sflag [#allocation4], 75
  %1713 = vsyncmov %s1712
  %s1714 = vpop.sfrf %1713
  %p1715 = scmp.eq.s32.totalorder %s1714, 0
  %p1716 = pneg %p1715
  %1718 = shalt.err (%p1716)
  %s1719 = scalar_lea.sflag [#allocation4], 76
  %1720 = vsyncmov %s1719
  %s1721 = vpop.sfrf %1720
  %p1722 = scmp.eq.s32.totalorder %s1721, 0
  %p1723 = pneg %p1722
  %1725 = shalt.err (%p1723)
  %s1726 = scalar_lea.sflag [#allocation4], 77
  %1727 = vsyncmov %s1726
  %s1728 = vpop.sfrf %1727
  %p1729 = scmp.eq.s32.totalorder %s1728, 0
  %p1730 = pneg %p1729
  %1732 = shalt.err (%p1730)
  %s1733 = scalar_lea.sflag [#allocation4], 78
  %1734 = vsyncmov %s1733
  %s1735 = vpop.sfrf %1734
  %p1736 = scmp.eq.s32.totalorder %s1735, 0
  %p1737 = pneg %p1736
  %1739 = shalt.err (%p1737)
  %s1740 = scalar_lea.sflag [#allocation4], 79
  %1741 = vsyncmov %s1740
  %s1742 = vpop.sfrf %1741
  %p1743 = scmp.eq.s32.totalorder %s1742, 0
  %p1744 = pneg %p1743
  %1746 = shalt.err (%p1744)
  %s1747 = scalar_lea.sflag [#allocation4], 80
  %1748 = vsyncmov %s1747
  %s1749 = vpop.sfrf %1748
  %p1750 = scmp.eq.s32.totalorder %s1749, 0
  %p1751 = pneg %p1750
  %1753 = shalt.err (%p1751)
  %s1754 = scalar_lea.sflag [#allocation4], 81
  %1755 = vsyncmov %s1754
  %s1756 = vpop.sfrf %1755
  %p1757 = scmp.eq.s32.totalorder %s1756, 0
  %p1758 = pneg %p1757
  %1760 = shalt.err (%p1758)
  %s1761 = scalar_lea.sflag [#allocation4], 82
  %1762 = vsyncmov %s1761
  %s1763 = vpop.sfrf %1762
  %p1764 = scmp.eq.s32.totalorder %s1763, 0
  %p1765 = pneg %p1764
  %1767 = shalt.err (%p1765)
  %s1768 = scalar_lea.sflag [#allocation4], 83
  %1769 = vsyncmov %s1768
  %s1770 = vpop.sfrf %1769
  %p1771 = scmp.eq.s32.totalorder %s1770, 0
  %p1772 = pneg %p1771
  %1774 = shalt.err (%p1772)
  %s1775 = scalar_lea.sflag [#allocation4], 84
  %1776 = vsyncmov %s1775
  %s1777 = vpop.sfrf %1776
  %p1778 = scmp.eq.s32.totalorder %s1777, 0
  %p1779 = pneg %p1778
  %1781 = shalt.err (%p1779)
  %s1782 = scalar_lea.sflag [#allocation4], 85
  %1783 = vsyncmov %s1782
  %s1784 = vpop.sfrf %1783
  %p1785 = scmp.eq.s32.totalorder %s1784, 0
  %p1786 = pneg %p1785
  %1788 = shalt.err (%p1786)
  %s1789 = scalar_lea.sflag [#allocation4], 86
  %1790 = vsyncmov %s1789
  %s1791 = vpop.sfrf %1790
  %p1792 = scmp.eq.s32.totalorder %s1791, 0
  %p1793 = pneg %p1792
  %1795 = shalt.err (%p1793)
  %s1796 = scalar_lea.sflag [#allocation4], 87
  %1797 = vsyncmov %s1796
  %s1798 = vpop.sfrf %1797
  %p1799 = scmp.eq.s32.totalorder %s1798, 0
  %p1800 = pneg %p1799
  %1802 = shalt.err (%p1800)
  %s1803 = scalar_lea.sflag [#allocation4], 88
  %1804 = vsyncmov %s1803
  %s1805 = vpop.sfrf %1804
  %p1806 = scmp.eq.s32.totalorder %s1805, 0
  %p1807 = pneg %p1806
  %1809 = shalt.err (%p1807)
  %s1810 = scalar_lea.sflag [#allocation4], 89
  %1811 = vsyncmov %s1810
  %s1812 = vpop.sfrf %1811
  %p1813 = scmp.eq.s32.totalorder %s1812, 0
  %p1814 = pneg %p1813
  %1816 = shalt.err (%p1814)
  %s1817 = scalar_lea.sflag [#allocation4], 90
  %1818 = vsyncmov %s1817
  %s1819 = vpop.sfrf %1818
  %p1820 = scmp.eq.s32.totalorder %s1819, 0
  %p1821 = pneg %p1820
  %1823 = shalt.err (%p1821)
  %s1824 = scalar_lea.sflag [#allocation4], 91
  %1825 = vsyncmov %s1824
  %s1826 = vpop.sfrf %1825
  %p1827 = scmp.eq.s32.totalorder %s1826, 0
  %p1828 = pneg %p1827
  %1830 = shalt.err (%p1828)
  %s1831 = scalar_lea.sflag [#allocation4], 92
  %1832 = vsyncmov %s1831
  %s1833 = vpop.sfrf %1832
  %p1834 = scmp.eq.s32.totalorder %s1833, 0
  %p1835 = pneg %p1834
  %1837 = shalt.err (%p1835)
  %s1838 = scalar_lea.sflag [#allocation4], 93
  %1839 = vsyncmov %s1838
  %s1840 = vpop.sfrf %1839
  %p1841 = scmp.eq.s32.totalorder %s1840, 0
  %p1842 = pneg %p1841
  %1844 = shalt.err (%p1842)
  %s1845 = scalar_lea.sflag [#allocation4], 94
  %1846 = vsyncmov %s1845
  %s1847 = vpop.sfrf %1846
  %p1848 = scmp.eq.s32.totalorder %s1847, 0
  %p1849 = pneg %p1848
  %1851 = shalt.err (%p1849)
  %s1852 = scalar_lea.sflag [#allocation4], 95
  %1853 = vsyncmov %s1852
  %s1854 = vpop.sfrf %1853
  %p1855 = scmp.eq.s32.totalorder %s1854, 0
  %p1856 = pneg %p1855
  %1858 = shalt.err (%p1856)
  %s1859 = scalar_lea.sflag [#allocation4], 96
  %1860 = vsyncmov %s1859
  %s1861 = vpop.sfrf %1860
  %p1862 = scmp.eq.s32.totalorder %s1861, 0
  %p1863 = pneg %p1862
  %1865 = shalt.err (%p1863)
  %s1866 = scalar_lea.sflag [#allocation4], 97
  %1867 = vsyncmov %s1866
  %s1868 = vpop.sfrf %1867
  %p1869 = scmp.eq.s32.totalorder %s1868, 0
  %p1870 = pneg %p1869
  %1872 = shalt.err (%p1870)
  %s1873 = scalar_lea.sflag [#allocation4], 98
  %1874 = vsyncmov %s1873
  %s1875 = vpop.sfrf %1874
  %p1876 = scmp.eq.s32.totalorder %s1875, 0
  %p1877 = pneg %p1876
  %1879 = shalt.err (%p1877)
  %s1880 = scalar_lea.sflag [#allocation4], 99
  %1881 = vsyncmov %s1880
  %s1882 = vpop.sfrf %1881
  %p1883 = scmp.eq.s32.totalorder %s1882, 0
  %p1884 = pneg %p1883
  %1886 = shalt.err (%p1884)
  %s1887 = scalar_lea.sflag [#allocation4], 100
  %1888 = vsyncmov %s1887
  %s1889 = vpop.sfrf %1888
  %p1890 = scmp.eq.s32.totalorder %s1889, 0
  %p1891 = pneg %p1890
  %1893 = shalt.err (%p1891)
  %s1894 = scalar_lea.sflag [#allocation4], 101
  %1895 = vsyncmov %s1894
  %s1896 = vpop.sfrf %1895
  %p1897 = scmp.eq.s32.totalorder %s1896, 0
  %p1898 = pneg %p1897
  %1900 = shalt.err (%p1898)
  %s1901 = scalar_lea.sflag [#allocation4], 102
  %1902 = vsyncmov %s1901
  %s1903 = vpop.sfrf %1902
  %p1904 = scmp.eq.s32.totalorder %s1903, 0
  %p1905 = pneg %p1904
  %1907 = shalt.err (%p1905)
  %s1908 = scalar_lea.sflag [#allocation4], 103
  %1909 = vsyncmov %s1908
  %s1910 = vpop.sfrf %1909
  %p1911 = scmp.eq.s32.totalorder %s1910, 0
  %p1912 = pneg %p1911
  %1914 = shalt.err (%p1912)
  %s1915 = scalar_lea.sflag [#allocation4], 104
  %1916 = vsyncmov %s1915
  %s1917 = vpop.sfrf %1916
  %p1918 = scmp.eq.s32.totalorder %s1917, 0
  %p1919 = pneg %p1918
  %1921 = shalt.err (%p1919)
  %s1922 = scalar_lea.sflag [#allocation4], 105
  %1923 = vsyncmov %s1922
  %s1924 = vpop.sfrf %1923
  %p1925 = scmp.eq.s32.totalorder %s1924, 0
  %p1926 = pneg %p1925
  %1928 = shalt.err (%p1926)
  %s1929 = scalar_lea.sflag [#allocation4], 106
  %1930 = vsyncmov %s1929
  %s1931 = vpop.sfrf %1930
  %p1932 = scmp.eq.s32.totalorder %s1931, 0
  %p1933 = pneg %p1932
  %1935 = shalt.err (%p1933)
  %s1936 = scalar_lea.sflag [#allocation4], 107
  %1937 = vsyncmov %s1936
  %s1938 = vpop.sfrf %1937
  %p1939 = scmp.eq.s32.totalorder %s1938, 0
  %p1940 = pneg %p1939
  %1942 = shalt.err (%p1940)
  %s1943 = scalar_lea.sflag [#allocation4], 108
  %1944 = vsyncmov %s1943
  %s1945 = vpop.sfrf %1944
  %p1946 = scmp.eq.s32.totalorder %s1945, 0
  %p1947 = pneg %p1946
  %1949 = shalt.err (%p1947)
  %s1950 = scalar_lea.sflag [#allocation4], 109
  %1951 = vsyncmov %s1950
  %s1952 = vpop.sfrf %1951
  %p1953 = scmp.eq.s32.totalorder %s1952, 0
  %p1954 = pneg %p1953
  %1956 = shalt.err (%p1954)
  %s1957 = scalar_lea.sflag [#allocation4], 110
  %1958 = vsyncmov %s1957
  %s1959 = vpop.sfrf %1958
  %p1960 = scmp.eq.s32.totalorder %s1959, 0
  %p1961 = pneg %p1960
  %1963 = shalt.err (%p1961)
  %s1964 = scalar_lea.sflag [#allocation4], 111
  %1965 = vsyncmov %s1964
  %s1966 = vpop.sfrf %1965
  %p1967 = scmp.eq.s32.totalorder %s1966, 0
  %p1968 = pneg %p1967
  %1970 = shalt.err (%p1968)
  %s1971 = scalar_lea.sflag [#allocation4], 112
  %1972 = vsyncmov %s1971
  %s1973 = vpop.sfrf %1972
  %p1974 = scmp.eq.s32.totalorder %s1973, 0
  %p1975 = pneg %p1974
  %1977 = shalt.err (%p1975)
  %s1978 = scalar_lea.sflag [#allocation4], 113
  %1979 = vsyncmov %s1978
  %s1980 = vpop.sfrf %1979
  %p1981 = scmp.eq.s32.totalorder %s1980, 0
  %p1982 = pneg %p1981
  %1984 = shalt.err (%p1982)
  %s1985 = scalar_lea.sflag [#allocation4], 114
  %1986 = vsyncmov %s1985
  %s1987 = vpop.sfrf %1986
  %p1988 = scmp.eq.s32.totalorder %s1987, 0
  %p1989 = pneg %p1988
  %1991 = shalt.err (%p1989)
  %s1992 = scalar_lea.sflag [#allocation4], 115
  %1993 = vsyncmov %s1992
  %s1994 = vpop.sfrf %1993
  %p1995 = scmp.eq.s32.totalorder %s1994, 0
  %p1996 = pneg %p1995
  %1998 = shalt.err (%p1996)
  %s1999 = scalar_lea.sflag [#allocation4], 116
  %2000 = vsyncmov %s1999
  %s2001 = vpop.sfrf %2000
  %p2002 = scmp.eq.s32.totalorder %s2001, 0
  %p2003 = pneg %p2002
  %2005 = shalt.err (%p2003)
  %s2006 = scalar_lea.sflag [#allocation4], 117
  %2007 = vsyncmov %s2006
  %s2008 = vpop.sfrf %2007
  %p2009 = scmp.eq.s32.totalorder %s2008, 0
  %p2010 = pneg %p2009
  %2012 = shalt.err (%p2010)
  %s2013 = scalar_lea.sflag [#allocation4], 118
  %2014 = vsyncmov %s2013
  %s2015 = vpop.sfrf %2014
  %p2016 = scmp.eq.s32.totalorder %s2015, 0
  %p2017 = pneg %p2016
  %2019 = shalt.err (%p2017)
  %s2020 = scalar_lea.sflag [#allocation4], 119
  %2021 = vsyncmov %s2020
  %s2022 = vpop.sfrf %2021
  %p2023 = scmp.eq.s32.totalorder %s2022, 0
  %p2024 = pneg %p2023
  %2026 = shalt.err (%p2024)
  %s2027 = scalar_lea.sflag [#allocation4], 120
  %2028 = vsyncmov %s2027
  %s2029 = vpop.sfrf %2028
  %p2030 = scmp.eq.s32.totalorder %s2029, 0
  %p2031 = pneg %p2030
  %2033 = shalt.err (%p2031)
  %s2034 = scalar_lea.sflag [#allocation4], 121
  %2035 = vsyncmov %s2034
  %s2036 = vpop.sfrf %2035
  %p2037 = scmp.eq.s32.totalorder %s2036, 0
  %p2038 = pneg %p2037
  %2040 = shalt.err (%p2038)
  %s2041 = scalar_lea.sflag [#allocation4], 122
  %2042 = vsyncmov %s2041
  %s2043 = vpop.sfrf %2042
  %p2044 = scmp.eq.s32.totalorder %s2043, 0
  %p2045 = pneg %p2044
  %2047 = shalt.err (%p2045)
  %s2048 = scalar_lea.sflag [#allocation4], 123
  %2049 = vsyncmov %s2048
  %s2050 = vpop.sfrf %2049
  %p2051 = scmp.eq.s32.totalorder %s2050, 0
  %p2052 = pneg %p2051
  %2054 = shalt.err (%p2052)
  %s2055 = scalar_lea.sflag [#allocation4], 124
  %2056 = vsyncmov %s2055
  %s2057 = vpop.sfrf %2056
  %p2058 = scmp.eq.s32.totalorder %s2057, 0
  %p2059 = pneg %p2058
  %2061 = shalt.err (%p2059)
  %s2062 = scalar_lea.sflag [#allocation4], 125
  %2063 = vsyncmov %s2062
  %s2064 = vpop.sfrf %2063
  %p2065 = scmp.eq.s32.totalorder %s2064, 0
  %p2066 = pneg %p2065
  %2068 = shalt.err (%p2066)
  %s2069 = scalar_lea.sflag [#allocation4], 126
  %2070 = vsyncmov %s2069
  %s2071 = vpop.sfrf %2070
  %p2072 = scmp.eq.s32.totalorder %s2071, 0
  %p2073 = pneg %p2072
  %2075 = shalt.err (%p2073)
  %s2076 = scalar_lea.sflag [#allocation4], 127
  %2077 = vsyncmov %s2076
  %s2078 = vpop.sfrf %2077
  %p2079 = scmp.eq.s32.totalorder %s2078, 0
  %p2080 = pneg %p2079
  %2082 = shalt.err (%p2080)

</llo_original>
